<compile_context>
chip_gen: v6e
topology: v6e:2x2x1
jax: 0.10.0
libtpu: 0.0.40
codegen_flags: <defaults>
</compile_context>

<pallas_src>
import jax
import jax.numpy as jnp
from jax.experimental import pallas as pl
from jax.experimental.pallas import tpu as pltpu

D_MODEL = 256
MLP_HIDDEN = 128
V_CHANNELS = 4
V_FEAT = 128
OUT_CLASSES = 3
OUT_PAD = 128          # lane-dense cl-head width (sliced back to 3 outside)
B_TILE_MAX = 256       # batch tile cap (keeps fused kernel well under VMEM)
EPS = 1e-5
INV_SQRT2 = 0.7071067811865476


def _layernorm(x, gamma, beta):
    mu = jnp.mean(x, axis=-1, keepdims=True)
    var = jnp.mean((x - mu) ** 2, axis=-1, keepdims=True)
    return (x - mu) * jax.lax.rsqrt(var + EPS) * gamma + beta


def _gelu(x):
    # exact (erf) GELU, matching torch.nn.GELU() default
    return 0.5 * x * (1.0 + jax.lax.erf(x * INV_SQRT2))


def _proj(x, w_ref, b_ref):
    # bf16 operands -> MXU bf16 path, f32 accumulate, f32 bias add
    return jnp.dot(x.astype(jnp.bfloat16), w_ref[...],
                   preferred_element_type=jnp.float32) + b_ref[...]


# -----------------------------------------------------------------------------
# Fused kernel: entire AVModelV3 LATE forward for one batch tile.
# -----------------------------------------------------------------------------
def fused_kernel(a_ref, v_ref, dsw1_ref, dsb1_ref, dsw2_ref, dsb2_ref, *rest):
    av_prm = rest[0:10]          # mtcma_av params (with folded Wv@Wo)
    va_prm = rest[10:20]         # mtcma_va params
    wg_ref, bg_ref, wa_ref, ba_ref, wc_ref, bc_ref, o_ref = rest[20:]

    f32 = jnp.float32
    a = a_ref[...].astype(f32)                                   # (bt, 256)

    # ---- downsampling_v: Permute -> Linear(4,1) -> Permute -> Linear(128,256)
    # Linear(4,1) over the channel dim == 4-term weighted sum on the VPU,
    # with the 4 scalar weights + bias read from SMEM.
    x128 = v_ref[:, 0, :].astype(f32) * dsw1_ref[0]
    for c in range(1, V_CHANNELS):
        x128 = x128 + v_ref[:, c, :].astype(f32) * dsw1_ref[c]
    x128 = x128 + dsb1_ref[0]                                    # (bt, 128)
    v256 = _proj(x128, dsw2_ref, dsb2_ref)                       # (bt, 256)

    # ---- MTCMAModelV2 with Sq == Sk == 1 (LATE path):
    # softmax over a single key == 1 exactly, so attention(q,k,v) collapses to
    # (LN_v(v) @ Wv + bv) @ Wo + bo == LN_v(v) @ (Wv@Wo) + (bv@Wo + bo).
    # Wv@Wo is pre-folded into a single (256,256) bf16 matrix (exact identity);
    # q/k LayerNorms and Q/K projections are exactly dead code here (guarded by
    # the static shape assert in the wrapper).
    def mtcma_late(values, prm):
        (g_v, b_v, wvo, bvo, w1, b1, gm, bm, w2, b2) = prm
        vn = _layernorm(values, g_v[...], b_v[...])
        x = _proj(vn, wvo, bvo)                                  # fused V + output proj
        h = _gelu(_proj(x, w1, b1))                              # Linear(256,128)+GELU
        h = _layernorm(h, gm[...], bm[...])                      # LayerNorm(128)
        h = _gelu(_proj(h, w2, b2))                              # Linear(128,256)+GELU
        return x + h                                             # x = x + mlp(x)

    av = a + mtcma_late(v256, av_prm)      # av = a + mtcma_av(q=a, k=v, v=v)
    va = v256 + mtcma_late(a, va_prm)      # va = v + mtcma_va(q=v, k=a, v=a)

    # ---- gender / age branches + classification head (lane-dense 128-wide out)
    g = jnp.maximum(_proj(av, wg_ref, bg_ref), 0.0)
    ag = jnp.maximum(_proj(va, wa_ref, ba_ref), 0.0)
    o_ref[...] = _proj(g + ag, wc_ref, bc_ref).astype(o_ref.dtype)


# -----------------------------------------------------------------------------
# Wrapper
# -----------------------------------------------------------------------------
def _resident(arr):
    n = arr.ndim
    return pl.BlockSpec(arr.shape, lambda *_, n=n: (0,) * n)


def _mtcma_args(p):
    return (p["ln_v_g"], p["ln_v_b"], p["wvo"], p["bvo"],
            p["mlp_w1"], p["mlp_b1"], p["mlp_ln_g"], p["mlp_ln_b"],
            p["mlp_w2"], p["mlp_b2"])


def _round_up(x, m):
    return (x + m - 1) // m * m


@jax.jit
def av_model_v3_forward(a, v, params):
    bs = a.shape[0]
    # Static LATE-path shape guard (also validates the seq_len==1 attention identity).
    assert a.shape == (bs, D_MODEL), a.shape
    assert v.shape == (bs, V_CHANNELS, V_FEAT), v.shape

    bt = min(B_TILE_MAX, _round_up(bs, 8))      # dense sublane packing
    bs_p = _round_up(bs, bt)
    if bs_p != bs:                              # zero-pad batch to a tile multiple
        a = jnp.pad(a, ((0, bs_p - bs), (0, 0)))
        v = jnp.pad(v, ((0, bs_p - bs), (0, 0), (0, 0)))

    weight_args = (params["ds_v_w2"], params["ds_v_b2"],
                   *_mtcma_args(params["mtcma_av"]),
                   *_mtcma_args(params["mtcma_va"]),
                   params["gender_w"], params["gender_b"],
                   params["age_w"], params["age_b"],
                   params["cl_w"], params["cl_b"])

    in_specs = (
        [pl.BlockSpec((bt, D_MODEL), lambda i: (i, 0)),
         pl.BlockSpec((bt, V_CHANNELS, V_FEAT), lambda i: (i, 0, 0)),
         pl.BlockSpec(memory_space=pltpu.MemorySpace.SMEM),     # Linear(4,1) weight
         pl.BlockSpec(memory_space=pltpu.MemorySpace.SMEM)]     # Linear(4,1) bias
        + [_resident(w) for w in weight_args])                  # VMEM-resident weights

    out = pl.pallas_call(
        fused_kernel,
        out_shape=jax.ShapeDtypeStruct((bs_p, OUT_PAD), jnp.float32),
        grid=(bs_p // bt,),
        in_specs=in_specs,
        out_specs=pl.BlockSpec((bt, OUT_PAD), lambda i: (i, 0)),
        compiler_params=pltpu.CompilerParams(
            dimension_semantics=("parallel",)),
    )(a, v, params["ds_v_w1"], params["ds_v_b1"], *weight_args)

    return out[:bs, :OUT_CLASSES]               # (bs, 3)


# -----------------------------------------------------------------------------
# Parameter init (deterministic, synthetic).  Linear weights stored
# (in_features, out_features) so y = x @ W + b.  Matmul weights in bf16.
# norm_q / norm_k and the Q/K projections of each MTCMA block are omitted:
# they are mathematically dead on the LATE (seq_len == 1) path.  The V and
# output projections of MultiHeadAttention are folded into one matrix
# (W_vo = Wv @ Wo, b_vo = bv @ Wo + bo) at init time — an exact identity.
# -----------------------------------------------------------------------------
def init_params(key):
    keys = iter(jax.random.split(key, 64))

    def wf32(shape, scale=0.05):
        return scale * jax.random.normal(next(keys), shape, jnp.float32)

    def w(shape, scale=0.05):
        return wf32(shape, scale).astype(jnp.bfloat16)

    def zeros(shape):
        return jnp.zeros(shape, jnp.float32)

    def ones(shape):
        return jnp.ones(shape, jnp.float32)

    def mtcma_params():
        wv = wf32((D_MODEL, D_MODEL))
        bv = zeros((1, D_MODEL))
        wo = wf32((D_MODEL, D_MODEL))
        bo = zeros((1, D_MODEL))
        wvo = (wv @ wo).astype(jnp.bfloat16)          # folded V + output proj
        bvo = bv @ wo + bo
        return dict(
            ln_v_g=ones((1, D_MODEL)), ln_v_b=zeros((1, D_MODEL)),
            wvo=wvo, bvo=bvo,
            mlp_w1=w((D_MODEL, MLP_HIDDEN)), mlp_b1=zeros((1, MLP_HIDDEN)),
            mlp_ln_g=ones((1, MLP_HIDDEN)), mlp_ln_b=zeros((1, MLP_HIDDEN)),
            mlp_w2=w((MLP_HIDDEN, D_MODEL)), mlp_b2=zeros((1, D_MODEL)),
        )

    # TODO(synk): AGenderClassificationHead definition not provided; assumed a
    #             single nn.Linear(256, output_size=3).  Padded to 128 lanes.
    cl_w3 = wf32((D_MODEL, OUT_CLASSES))
    cl_b3 = jnp.zeros((1, OUT_CLASSES), jnp.float32)

    return dict(
        ds_v_w1=wf32((V_CHANNELS,)),            # Linear(4,1) weight (SMEM scalars)
        ds_v_b1=zeros((1,)),                    # Linear(4,1) bias   (SMEM scalar)
        ds_v_w2=w((V_FEAT, D_MODEL)), ds_v_b2=zeros((1, D_MODEL)),
        mtcma_av=mtcma_params(), mtcma_va=mtcma_params(),
        gender_w=w((D_MODEL, D_MODEL)), gender_b=zeros((1, D_MODEL)),
        age_w=w((D_MODEL, D_MODEL)), age_b=zeros((1, D_MODEL)),
        cl_w=jnp.pad(cl_w3, ((0, 0), (0, OUT_PAD - OUT_CLASSES))
                     ).astype(jnp.bfloat16),
        cl_b=jnp.pad(cl_b3, ((0, 0), (0, OUT_PAD - OUT_CLASSES))),
    )


if __name__ == "__main__":
    key = jax.random.PRNGKey(0)
    kp, ka, kv = jax.random.split(key, 3)
    params = init_params(kp)

    batch = 2
    a = jax.random.normal(ka, (batch, D_MODEL), jnp.float32)            # audio (LATE)
    v = jax.random.normal(kv, (batch, V_CHANNELS, V_FEAT), jnp.float32)  # video (LATE)

    out = av_model_v3_forward(a, v, params)
    jax.block_until_ready(out)
    assert out.shape == (batch, OUT_CLASSES), out.shape
    print("KERNEL_OK")
</pallas_src>

<mosaic_0001>
module attributes {stable_mosaic.version = 11 : i64} {
  func.func @fused_kernel(%arg0: i32, %arg1: memref<8x256xf32, #tpu.memory_space<vmem>>, %arg2: memref<8x4x128xf32, #tpu.memory_space<vmem>>, %arg3: memref<4xf32, #tpu.memory_space<smem>>, %arg4: memref<1xf32, #tpu.memory_space<smem>>, %arg5: memref<128x256xbf16, #tpu.memory_space<vmem>>, %arg6: memref<1x256xf32, #tpu.memory_space<vmem>>, %arg7: memref<1x256xf32, #tpu.memory_space<vmem>>, %arg8: memref<1x256xf32, #tpu.memory_space<vmem>>, %arg9: memref<256x256xbf16, #tpu.memory_space<vmem>>, %arg10: memref<1x256xf32, #tpu.memory_space<vmem>>, %arg11: memref<256x128xbf16, #tpu.memory_space<vmem>>, %arg12: memref<1x128xf32, #tpu.memory_space<vmem>>, %arg13: memref<1x128xf32, #tpu.memory_space<vmem>>, %arg14: memref<1x128xf32, #tpu.memory_space<vmem>>, %arg15: memref<128x256xbf16, #tpu.memory_space<vmem>>, %arg16: memref<1x256xf32, #tpu.memory_space<vmem>>, %arg17: memref<1x256xf32, #tpu.memory_space<vmem>>, %arg18: memref<1x256xf32, #tpu.memory_space<vmem>>, %arg19: memref<256x256xbf16, #tpu.memory_space<vmem>>, %arg20: memref<1x256xf32, #tpu.memory_space<vmem>>, %arg21: memref<256x128xbf16, #tpu.memory_space<vmem>>, %arg22: memref<1x128xf32, #tpu.memory_space<vmem>>, %arg23: memref<1x128xf32, #tpu.memory_space<vmem>>, %arg24: memref<1x128xf32, #tpu.memory_space<vmem>>, %arg25: memref<128x256xbf16, #tpu.memory_space<vmem>>, %arg26: memref<1x256xf32, #tpu.memory_space<vmem>>, %arg27: memref<256x256xbf16, #tpu.memory_space<vmem>>, %arg28: memref<1x256xf32, #tpu.memory_space<vmem>>, %arg29: memref<256x256xbf16, #tpu.memory_space<vmem>>, %arg30: memref<1x256xf32, #tpu.memory_space<vmem>>, %arg31: memref<256x128xbf16, #tpu.memory_space<vmem>>, %arg32: memref<1x128xf32, #tpu.memory_space<vmem>>, %arg33: memref<8x128xf32, #tpu.memory_space<vmem>>) attributes {dimension_semantics = [#tpu.dimension_semantics<parallel>], iteration_bounds = array<i64: 1>, scalar_prefetch = 0 : i64, scratch_operands = 0 : i64, tpu.core_type = #tpu.core_type<tc>, window_params = [{transform_indices = @transform_0, window_bounds = array<i64: 8, 256>}, {transform_indices = @transform_1, window_bounds = array<i64: 8, 4, 128>}, {transform_indices = @transform_2, window_bounds = array<i64: 4>}, {transform_indices = @transform_3, window_bounds = array<i64: 1>}, {pipeline_mode = #tpu.pipeline_mode<synchronous>, transform_indices = @transform_4, window_bounds = array<i64: 128, 256>}, {pipeline_mode = #tpu.pipeline_mode<synchronous>, transform_indices = @transform_5, window_bounds = array<i64: 1, 256>}, {pipeline_mode = #tpu.pipeline_mode<synchronous>, transform_indices = @transform_6, window_bounds = array<i64: 1, 256>}, {pipeline_mode = #tpu.pipeline_mode<synchronous>, transform_indices = @transform_7, window_bounds = array<i64: 1, 256>}, {pipeline_mode = #tpu.pipeline_mode<synchronous>, transform_indices = @transform_8, window_bounds = array<i64: 256, 256>}, {pipeline_mode = #tpu.pipeline_mode<synchronous>, transform_indices = @transform_9, window_bounds = array<i64: 1, 256>}, {pipeline_mode = #tpu.pipeline_mode<synchronous>, transform_indices = @transform_10, window_bounds = array<i64: 256, 128>}, {pipeline_mode = #tpu.pipeline_mode<synchronous>, transform_indices = @transform_11, window_bounds = array<i64: 1, 128>}, {pipeline_mode = #tpu.pipeline_mode<synchronous>, transform_indices = @transform_12, window_bounds = array<i64: 1, 128>}, {pipeline_mode = #tpu.pipeline_mode<synchronous>, transform_indices = @transform_13, window_bounds = array<i64: 1, 128>}, {pipeline_mode = #tpu.pipeline_mode<synchronous>, transform_indices = @transform_14, window_bounds = array<i64: 128, 256>}, {pipeline_mode = #tpu.pipeline_mode<synchronous>, transform_indices = @transform_15, window_bounds = array<i64: 1, 256>}, {pipeline_mode = #tpu.pipeline_mode<synchronous>, transform_indices = @transform_16, window_bounds = array<i64: 1, 256>}, {pipeline_mode = #tpu.pipeline_mode<synchronous>, transform_indices = @transform_17, window_bounds = array<i64: 1, 256>}, {pipeline_mode = #tpu.pipeline_mode<synchronous>, transform_indices = @transform_18, window_bounds = array<i64: 256, 256>}, {pipeline_mode = #tpu.pipeline_mode<synchronous>, transform_indices = @transform_19, window_bounds = array<i64: 1, 256>}, {pipeline_mode = #tpu.pipeline_mode<synchronous>, transform_indices = @transform_20, window_bounds = array<i64: 256, 128>}, {pipeline_mode = #tpu.pipeline_mode<synchronous>, transform_indices = @transform_21, window_bounds = array<i64: 1, 128>}, {pipeline_mode = #tpu.pipeline_mode<synchronous>, transform_indices = @transform_22, window_bounds = array<i64: 1, 128>}, {pipeline_mode = #tpu.pipeline_mode<synchronous>, transform_indices = @transform_23, window_bounds = array<i64: 1, 128>}, {pipeline_mode = #tpu.pipeline_mode<synchronous>, transform_indices = @transform_24, window_bounds = array<i64: 128, 256>}, {pipeline_mode = #tpu.pipeline_mode<synchronous>, transform_indices = @transform_25, window_bounds = array<i64: 1, 256>}, {pipeline_mode = #tpu.pipeline_mode<synchronous>, transform_indices = @transform_26, window_bounds = array<i64: 256, 256>}, {pipeline_mode = #tpu.pipeline_mode<synchronous>, transform_indices = @transform_27, window_bounds = array<i64: 1, 256>}, {pipeline_mode = #tpu.pipeline_mode<synchronous>, transform_indices = @transform_28, window_bounds = array<i64: 256, 256>}, {pipeline_mode = #tpu.pipeline_mode<synchronous>, transform_indices = @transform_29, window_bounds = array<i64: 1, 256>}, {pipeline_mode = #tpu.pipeline_mode<synchronous>, transform_indices = @transform_30, window_bounds = array<i64: 256, 128>}, {pipeline_mode = #tpu.pipeline_mode<synchronous>, transform_indices = @transform_31, window_bounds = array<i64: 1, 128>}, {transform_indices = @transform_32, window_bounds = array<i64: 8, 128>}]} {
    %c0 = arith.constant 0 : index
    %c0_0 = arith.constant 0 : index
    %0 = vector.load %arg1[%c0, %c0_0] : memref<8x256xf32, #tpu.memory_space<vmem>>, vector<8x256xf32>
    %c0_1 = arith.constant 0 : index
    %c0_2 = arith.constant 0 : index
    %c0_3 = arith.constant 0 : index
    %1 = vector.load %arg2[%c0_1, %c0_2, %c0_3] : memref<8x4x128xf32, #tpu.memory_space<vmem>>, vector<8x1x128xf32>
    %2 = vector.shape_cast %1 : vector<8x1x128xf32> to vector<8x128xf32>
    %c0_4 = arith.constant 0 : index
    %3 = memref.load %arg3[%c0_4] : memref<4xf32, #tpu.memory_space<smem>>
    %4 = vector.broadcast %3 : f32 to vector<8x128xf32>
    %5 = arith.mulf %2, %4 : vector<8x128xf32>
    %c0_5 = arith.constant 0 : index
    %c1 = arith.constant 1 : index
    %c0_6 = arith.constant 0 : index
    %6 = vector.load %arg2[%c0_5, %c1, %c0_6] : memref<8x4x128xf32, #tpu.memory_space<vmem>>, vector<8x1x128xf32>
    %7 = vector.shape_cast %6 : vector<8x1x128xf32> to vector<8x128xf32>
    %c1_7 = arith.constant 1 : index
    %8 = memref.load %arg3[%c1_7] : memref<4xf32, #tpu.memory_space<smem>>
    %9 = vector.broadcast %8 : f32 to vector<8x128xf32>
    %10 = arith.mulf %7, %9 : vector<8x128xf32>
    %11 = arith.addf %5, %10 : vector<8x128xf32>
    %c0_8 = arith.constant 0 : index
    %c2 = arith.constant 2 : index
    %c0_9 = arith.constant 0 : index
    %12 = vector.load %arg2[%c0_8, %c2, %c0_9] : memref<8x4x128xf32, #tpu.memory_space<vmem>>, vector<8x1x128xf32>
    %13 = vector.shape_cast %12 : vector<8x1x128xf32> to vector<8x128xf32>
    %c2_10 = arith.constant 2 : index
    %14 = memref.load %arg3[%c2_10] : memref<4xf32, #tpu.memory_space<smem>>
    %15 = vector.broadcast %14 : f32 to vector<8x128xf32>
    %16 = arith.mulf %13, %15 : vector<8x128xf32>
    %17 = arith.addf %11, %16 : vector<8x128xf32>
    %c0_11 = arith.constant 0 : index
    %c3 = arith.constant 3 : index
    %c0_12 = arith.constant 0 : index
    %18 = vector.load %arg2[%c0_11, %c3, %c0_12] : memref<8x4x128xf32, #tpu.memory_space<vmem>>, vector<8x1x128xf32>
    %19 = vector.shape_cast %18 : vector<8x1x128xf32> to vector<8x128xf32>
    %c3_13 = arith.constant 3 : index
    %20 = memref.load %arg3[%c3_13] : memref<4xf32, #tpu.memory_space<smem>>
    %21 = vector.broadcast %20 : f32 to vector<8x128xf32>
    %22 = arith.mulf %19, %21 : vector<8x128xf32>
    %23 = arith.addf %17, %22 : vector<8x128xf32>
    %c0_14 = arith.constant 0 : index
    %24 = memref.load %arg4[%c0_14] : memref<1xf32, #tpu.memory_space<smem>>
    %25 = vector.broadcast %24 : f32 to vector<8x128xf32>
    %26 = arith.addf %23, %25 : vector<8x128xf32>
    %27 = arith.truncf %26 : vector<8x128xf32> to vector<8x128xbf16>
    %c0_15 = arith.constant 0 : index
    %c0_16 = arith.constant 0 : index
    %28 = vector.load %arg5[%c0_15, %c0_16] : memref<128x256xbf16, #tpu.memory_space<vmem>>, vector<128x256xbf16>
    %cst = arith.constant dense<0.000000e+00> : vector<8x256xf32>
    %29 = tpu.matmul %27, %28, %cst {dimension_numbers = #tpu.dot_dimension_numbers<[1], [0], [0], [1], [0, 0, 1, 1], [], []>} : vector<8x128xbf16>, vector<128x256xbf16>, vector<8x256xf32> -> vector<8x256xf32>
    %c0_17 = arith.constant 0 : index
    %c0_18 = arith.constant 0 : index
    %30 = vector.load %arg6[%c0_17, %c0_18] : memref<1x256xf32, #tpu.memory_space<vmem>>, vector<1x256xf32>
    %31 = vector.broadcast %30 : vector<1x256xf32> to vector<8x256xf32>
    %32 = arith.addf %29, %31 : vector<8x256xf32>
    %c0_19 = arith.constant 0 : index
    %c0_20 = arith.constant 0 : index
    %33 = vector.load %arg7[%c0_19, %c0_20] : memref<1x256xf32, #tpu.memory_space<vmem>>, vector<1x256xf32>
    %c0_21 = arith.constant 0 : index
    %c0_22 = arith.constant 0 : index
    %34 = vector.load %arg8[%c0_21, %c0_22] : memref<1x256xf32, #tpu.memory_space<vmem>>, vector<1x256xf32>
    %cst_23 = arith.constant dense<0.000000e+00> : vector<8xf32>
    %35 = vector.multi_reduction <add>, %32, %cst_23 [1] : vector<8x256xf32> to vector<8xf32>
    %36 = vector.shape_cast %35 : vector<8xf32> to vector<8x1xf32>
    %cst_24 = arith.constant 2.560000e+02 : f32
    %37 = vector.broadcast %cst_24 : f32 to vector<8x1xf32>
    %38 = arith.divf %36, %37 : vector<8x1xf32>
    %39 = vector.broadcast %38 : vector<8x1xf32> to vector<8x256xf32>
    %40 = arith.subf %32, %39 : vector<8x256xf32>
    %41 = arith.mulf %40, %40 : vector<8x256xf32>
    %cst_25 = arith.constant dense<0.000000e+00> : vector<8xf32>
    %42 = vector.multi_reduction <add>, %41, %cst_25 [1] : vector<8x256xf32> to vector<8xf32>
    %43 = vector.shape_cast %42 : vector<8xf32> to vector<8x1xf32>
    %cst_26 = arith.constant 2.560000e+02 : f32
    %44 = vector.broadcast %cst_26 : f32 to vector<8x1xf32>
    %45 = arith.divf %43, %44 : vector<8x1xf32>
    %46 = vector.broadcast %38 : vector<8x1xf32> to vector<8x256xf32>
    %47 = arith.subf %32, %46 : vector<8x256xf32>
    %cst_27 = arith.constant 9.99999974E-6 : f32
    %48 = vector.broadcast %cst_27 : f32 to vector<8x1xf32>
    %49 = arith.addf %45, %48 : vector<8x1xf32>
    %50 = math.rsqrt %49 : vector<8x1xf32>
    %51 = vector.broadcast %50 : vector<8x1xf32> to vector<8x256xf32>
    %52 = arith.mulf %47, %51 : vector<8x256xf32>
    %53 = vector.broadcast %33 : vector<1x256xf32> to vector<8x256xf32>
    %54 = arith.mulf %52, %53 : vector<8x256xf32>
    %55 = vector.broadcast %34 : vector<1x256xf32> to vector<8x256xf32>
    %56 = arith.addf %54, %55 : vector<8x256xf32>
    %57 = arith.truncf %56 : vector<8x256xf32> to vector<8x256xbf16>
    %c0_28 = arith.constant 0 : index
    %c0_29 = arith.constant 0 : index
    %58 = vector.load %arg9[%c0_28, %c0_29] : memref<256x256xbf16, #tpu.memory_space<vmem>>, vector<256x256xbf16>
    %cst_30 = arith.constant dense<0.000000e+00> : vector<8x256xf32>
    %59 = tpu.matmul %57, %58, %cst_30 {dimension_numbers = #tpu.dot_dimension_numbers<[1], [0], [0], [1], [0, 0, 1, 1], [], []>} : vector<8x256xbf16>, vector<256x256xbf16>, vector<8x256xf32> -> vector<8x256xf32>
    %c0_31 = arith.constant 0 : index
    %c0_32 = arith.constant 0 : index
    %60 = vector.load %arg10[%c0_31, %c0_32] : memref<1x256xf32, #tpu.memory_space<vmem>>, vector<1x256xf32>
    %61 = vector.broadcast %60 : vector<1x256xf32> to vector<8x256xf32>
    %62 = arith.addf %59, %61 : vector<8x256xf32>
    %63 = arith.truncf %62 : vector<8x256xf32> to vector<8x256xbf16>
    %c0_33 = arith.constant 0 : index
    %c0_34 = arith.constant 0 : index
    %64 = vector.load %arg11[%c0_33, %c0_34] : memref<256x128xbf16, #tpu.memory_space<vmem>>, vector<256x128xbf16>
    %cst_35 = arith.constant dense<0.000000e+00> : vector<8x128xf32>
    %65 = tpu.matmul %63, %64, %cst_35 {dimension_numbers = #tpu.dot_dimension_numbers<[1], [0], [0], [1], [0, 0, 1, 1], [], []>} : vector<8x256xbf16>, vector<256x128xbf16>, vector<8x128xf32> -> vector<8x128xf32>
    %c0_36 = arith.constant 0 : index
    %c0_37 = arith.constant 0 : index
    %66 = vector.load %arg12[%c0_36, %c0_37] : memref<1x128xf32, #tpu.memory_space<vmem>>, vector<1x128xf32>
    %67 = vector.broadcast %66 : vector<1x128xf32> to vector<8x128xf32>
    %68 = arith.addf %65, %67 : vector<8x128xf32>
    %cst_38 = arith.constant 5.000000e-01 : f32
    %69 = vector.broadcast %cst_38 : f32 to vector<8x128xf32>
    %70 = arith.mulf %69, %68 : vector<8x128xf32>
    %cst_39 = arith.constant 0.707106769 : f32
    %71 = vector.broadcast %cst_39 : f32 to vector<8x128xf32>
    %72 = arith.mulf %68, %71 : vector<8x128xf32>
    %73 = math.erf %72 : vector<8x128xf32>
    %cst_40 = arith.constant 1.000000e+00 : f32
    %74 = vector.broadcast %cst_40 : f32 to vector<8x128xf32>
    %75 = arith.addf %74, %73 : vector<8x128xf32>
    %76 = arith.mulf %70, %75 : vector<8x128xf32>
    %c0_41 = arith.constant 0 : index
    %c0_42 = arith.constant 0 : index
    %77 = vector.load %arg13[%c0_41, %c0_42] : memref<1x128xf32, #tpu.memory_space<vmem>>, vector<1x128xf32>
    %c0_43 = arith.constant 0 : index
    %c0_44 = arith.constant 0 : index
    %78 = vector.load %arg14[%c0_43, %c0_44] : memref<1x128xf32, #tpu.memory_space<vmem>>, vector<1x128xf32>
    %cst_45 = arith.constant dense<0.000000e+00> : vector<8xf32>
    %79 = vector.multi_reduction <add>, %76, %cst_45 [1] : vector<8x128xf32> to vector<8xf32>
    %80 = vector.shape_cast %79 : vector<8xf32> to vector<8x1xf32>
    %cst_46 = arith.constant 1.280000e+02 : f32
    %81 = vector.broadcast %cst_46 : f32 to vector<8x1xf32>
    %82 = arith.divf %80, %81 : vector<8x1xf32>
    %83 = vector.broadcast %82 : vector<8x1xf32> to vector<8x128xf32>
    %84 = arith.subf %76, %83 : vector<8x128xf32>
    %85 = arith.mulf %84, %84 : vector<8x128xf32>
    %cst_47 = arith.constant dense<0.000000e+00> : vector<8xf32>
    %86 = vector.multi_reduction <add>, %85, %cst_47 [1] : vector<8x128xf32> to vector<8xf32>
    %87 = vector.shape_cast %86 : vector<8xf32> to vector<8x1xf32>
    %cst_48 = arith.constant 1.280000e+02 : f32
    %88 = vector.broadcast %cst_48 : f32 to vector<8x1xf32>
    %89 = arith.divf %87, %88 : vector<8x1xf32>
    %90 = vector.broadcast %82 : vector<8x1xf32> to vector<8x128xf32>
    %91 = arith.subf %76, %90 : vector<8x128xf32>
    %cst_49 = arith.constant 9.99999974E-6 : f32
    %92 = vector.broadcast %cst_49 : f32 to vector<8x1xf32>
    %93 = arith.addf %89, %92 : vector<8x1xf32>
    %94 = math.rsqrt %93 : vector<8x1xf32>
    %95 = vector.broadcast %94 : vector<8x1xf32> to vector<8x128xf32>
    %96 = arith.mulf %91, %95 : vector<8x128xf32>
    %97 = vector.broadcast %77 : vector<1x128xf32> to vector<8x128xf32>
    %98 = arith.mulf %96, %97 : vector<8x128xf32>
    %99 = vector.broadcast %78 : vector<1x128xf32> to vector<8x128xf32>
    %100 = arith.addf %98, %99 : vector<8x128xf32>
    %101 = arith.truncf %100 : vector<8x128xf32> to vector<8x128xbf16>
    %c0_50 = arith.constant 0 : index
    %c0_51 = arith.constant 0 : index
    %102 = vector.load %arg15[%c0_50, %c0_51] : memref<128x256xbf16, #tpu.memory_space<vmem>>, vector<128x256xbf16>
    %cst_52 = arith.constant dense<0.000000e+00> : vector<8x256xf32>
    %103 = tpu.matmul %101, %102, %cst_52 {dimension_numbers = #tpu.dot_dimension_numbers<[1], [0], [0], [1], [0, 0, 1, 1], [], []>} : vector<8x128xbf16>, vector<128x256xbf16>, vector<8x256xf32> -> vector<8x256xf32>
    %c0_53 = arith.constant 0 : index
    %c0_54 = arith.constant 0 : index
    %104 = vector.load %arg16[%c0_53, %c0_54] : memref<1x256xf32, #tpu.memory_space<vmem>>, vector<1x256xf32>
    %105 = vector.broadcast %104 : vector<1x256xf32> to vector<8x256xf32>
    %106 = arith.addf %103, %105 : vector<8x256xf32>
    %cst_55 = arith.constant 5.000000e-01 : f32
    %107 = vector.broadcast %cst_55 : f32 to vector<8x256xf32>
    %108 = arith.mulf %107, %106 : vector<8x256xf32>
    %cst_56 = arith.constant 0.707106769 : f32
    %109 = vector.broadcast %cst_56 : f32 to vector<8x256xf32>
    %110 = arith.mulf %106, %109 : vector<8x256xf32>
    %111 = math.erf %110 : vector<8x256xf32>
    %cst_57 = arith.constant 1.000000e+00 : f32
    %112 = vector.broadcast %cst_57 : f32 to vector<8x256xf32>
    %113 = arith.addf %112, %111 : vector<8x256xf32>
    %114 = arith.mulf %108, %113 : vector<8x256xf32>
    %115 = arith.addf %62, %114 : vector<8x256xf32>
    %116 = arith.addf %0, %115 : vector<8x256xf32>
    %c0_58 = arith.constant 0 : index
    %c0_59 = arith.constant 0 : index
    %117 = vector.load %arg17[%c0_58, %c0_59] : memref<1x256xf32, #tpu.memory_space<vmem>>, vector<1x256xf32>
    %c0_60 = arith.constant 0 : index
    %c0_61 = arith.constant 0 : index
    %118 = vector.load %arg18[%c0_60, %c0_61] : memref<1x256xf32, #tpu.memory_space<vmem>>, vector<1x256xf32>
    %cst_62 = arith.constant dense<0.000000e+00> : vector<8xf32>
    %119 = vector.multi_reduction <add>, %0, %cst_62 [1] : vector<8x256xf32> to vector<8xf32>
    %120 = vector.shape_cast %119 : vector<8xf32> to vector<8x1xf32>
    %cst_63 = arith.constant 2.560000e+02 : f32
    %121 = vector.broadcast %cst_63 : f32 to vector<8x1xf32>
    %122 = arith.divf %120, %121 : vector<8x1xf32>
    %123 = vector.broadcast %122 : vector<8x1xf32> to vector<8x256xf32>
    %124 = arith.subf %0, %123 : vector<8x256xf32>
    %125 = arith.mulf %124, %124 : vector<8x256xf32>
    %cst_64 = arith.constant dense<0.000000e+00> : vector<8xf32>
    %126 = vector.multi_reduction <add>, %125, %cst_64 [1] : vector<8x256xf32> to vector<8xf32>
    %127 = vector.shape_cast %126 : vector<8xf32> to vector<8x1xf32>
    %cst_65 = arith.constant 2.560000e+02 : f32
    %128 = vector.broadcast %cst_65 : f32 to vector<8x1xf32>
    %129 = arith.divf %127, %128 : vector<8x1xf32>
    %130 = vector.broadcast %122 : vector<8x1xf32> to vector<8x256xf32>
    %131 = arith.subf %0, %130 : vector<8x256xf32>
    %cst_66 = arith.constant 9.99999974E-6 : f32
    %132 = vector.broadcast %cst_66 : f32 to vector<8x1xf32>
    %133 = arith.addf %129, %132 : vector<8x1xf32>
    %134 = math.rsqrt %133 : vector<8x1xf32>
    %135 = vector.broadcast %134 : vector<8x1xf32> to vector<8x256xf32>
    %136 = arith.mulf %131, %135 : vector<8x256xf32>
    %137 = vector.broadcast %117 : vector<1x256xf32> to vector<8x256xf32>
    %138 = arith.mulf %136, %137 : vector<8x256xf32>
    %139 = vector.broadcast %118 : vector<1x256xf32> to vector<8x256xf32>
    %140 = arith.addf %138, %139 : vector<8x256xf32>
    %141 = arith.truncf %140 : vector<8x256xf32> to vector<8x256xbf16>
    %c0_67 = arith.constant 0 : index
    %c0_68 = arith.constant 0 : index
    %142 = vector.load %arg19[%c0_67, %c0_68] : memref<256x256xbf16, #tpu.memory_space<vmem>>, vector<256x256xbf16>
    %cst_69 = arith.constant dense<0.000000e+00> : vector<8x256xf32>
    %143 = tpu.matmul %141, %142, %cst_69 {dimension_numbers = #tpu.dot_dimension_numbers<[1], [0], [0], [1], [0, 0, 1, 1], [], []>} : vector<8x256xbf16>, vector<256x256xbf16>, vector<8x256xf32> -> vector<8x256xf32>
    %c0_70 = arith.constant 0 : index
    %c0_71 = arith.constant 0 : index
    %144 = vector.load %arg20[%c0_70, %c0_71] : memref<1x256xf32, #tpu.memory_space<vmem>>, vector<1x256xf32>
    %145 = vector.broadcast %144 : vector<1x256xf32> to vector<8x256xf32>
    %146 = arith.addf %143, %145 : vector<8x256xf32>
    %147 = arith.truncf %146 : vector<8x256xf32> to vector<8x256xbf16>
    %c0_72 = arith.constant 0 : index
    %c0_73 = arith.constant 0 : index
    %148 = vector.load %arg21[%c0_72, %c0_73] : memref<256x128xbf16, #tpu.memory_space<vmem>>, vector<256x128xbf16>
    %cst_74 = arith.constant dense<0.000000e+00> : vector<8x128xf32>
    %149 = tpu.matmul %147, %148, %cst_74 {dimension_numbers = #tpu.dot_dimension_numbers<[1], [0], [0], [1], [0, 0, 1, 1], [], []>} : vector<8x256xbf16>, vector<256x128xbf16>, vector<8x128xf32> -> vector<8x128xf32>
    %c0_75 = arith.constant 0 : index
    %c0_76 = arith.constant 0 : index
    %150 = vector.load %arg22[%c0_75, %c0_76] : memref<1x128xf32, #tpu.memory_space<vmem>>, vector<1x128xf32>
    %151 = vector.broadcast %150 : vector<1x128xf32> to vector<8x128xf32>
    %152 = arith.addf %149, %151 : vector<8x128xf32>
    %cst_77 = arith.constant 5.000000e-01 : f32
    %153 = vector.broadcast %cst_77 : f32 to vector<8x128xf32>
    %154 = arith.mulf %153, %152 : vector<8x128xf32>
    %cst_78 = arith.constant 0.707106769 : f32
    %155 = vector.broadcast %cst_78 : f32 to vector<8x128xf32>
    %156 = arith.mulf %152, %155 : vector<8x128xf32>
    %157 = math.erf %156 : vector<8x128xf32>
    %cst_79 = arith.constant 1.000000e+00 : f32
    %158 = vector.broadcast %cst_79 : f32 to vector<8x128xf32>
    %159 = arith.addf %158, %157 : vector<8x128xf32>
    %160 = arith.mulf %154, %159 : vector<8x128xf32>
    %c0_80 = arith.constant 0 : index
    %c0_81 = arith.constant 0 : index
    %161 = vector.load %arg23[%c0_80, %c0_81] : memref<1x128xf32, #tpu.memory_space<vmem>>, vector<1x128xf32>
    %c0_82 = arith.constant 0 : index
    %c0_83 = arith.constant 0 : index
    %162 = vector.load %arg24[%c0_82, %c0_83] : memref<1x128xf32, #tpu.memory_space<vmem>>, vector<1x128xf32>
    %cst_84 = arith.constant dense<0.000000e+00> : vector<8xf32>
    %163 = vector.multi_reduction <add>, %160, %cst_84 [1] : vector<8x128xf32> to vector<8xf32>
    %164 = vector.shape_cast %163 : vector<8xf32> to vector<8x1xf32>
    %cst_85 = arith.constant 1.280000e+02 : f32
    %165 = vector.broadcast %cst_85 : f32 to vector<8x1xf32>
    %166 = arith.divf %164, %165 : vector<8x1xf32>
    %167 = vector.broadcast %166 : vector<8x1xf32> to vector<8x128xf32>
    %168 = arith.subf %160, %167 : vector<8x128xf32>
    %169 = arith.mulf %168, %168 : vector<8x128xf32>
    %cst_86 = arith.constant dense<0.000000e+00> : vector<8xf32>
    %170 = vector.multi_reduction <add>, %169, %cst_86 [1] : vector<8x128xf32> to vector<8xf32>
    %171 = vector.shape_cast %170 : vector<8xf32> to vector<8x1xf32>
    %cst_87 = arith.constant 1.280000e+02 : f32
    %172 = vector.broadcast %cst_87 : f32 to vector<8x1xf32>
    %173 = arith.divf %171, %172 : vector<8x1xf32>
    %174 = vector.broadcast %166 : vector<8x1xf32> to vector<8x128xf32>
    %175 = arith.subf %160, %174 : vector<8x128xf32>
    %cst_88 = arith.constant 9.99999974E-6 : f32
    %176 = vector.broadcast %cst_88 : f32 to vector<8x1xf32>
    %177 = arith.addf %173, %176 : vector<8x1xf32>
    %178 = math.rsqrt %177 : vector<8x1xf32>
    %179 = vector.broadcast %178 : vector<8x1xf32> to vector<8x128xf32>
    %180 = arith.mulf %175, %179 : vector<8x128xf32>
    %181 = vector.broadcast %161 : vector<1x128xf32> to vector<8x128xf32>
    %182 = arith.mulf %180, %181 : vector<8x128xf32>
    %183 = vector.broadcast %162 : vector<1x128xf32> to vector<8x128xf32>
    %184 = arith.addf %182, %183 : vector<8x128xf32>
    %185 = arith.truncf %184 : vector<8x128xf32> to vector<8x128xbf16>
    %c0_89 = arith.constant 0 : index
    %c0_90 = arith.constant 0 : index
    %186 = vector.load %arg25[%c0_89, %c0_90] : memref<128x256xbf16, #tpu.memory_space<vmem>>, vector<128x256xbf16>
    %cst_91 = arith.constant dense<0.000000e+00> : vector<8x256xf32>
    %187 = tpu.matmul %185, %186, %cst_91 {dimension_numbers = #tpu.dot_dimension_numbers<[1], [0], [0], [1], [0, 0, 1, 1], [], []>} : vector<8x128xbf16>, vector<128x256xbf16>, vector<8x256xf32> -> vector<8x256xf32>
    %c0_92 = arith.constant 0 : index
    %c0_93 = arith.constant 0 : index
    %188 = vector.load %arg26[%c0_92, %c0_93] : memref<1x256xf32, #tpu.memory_space<vmem>>, vector<1x256xf32>
    %189 = vector.broadcast %188 : vector<1x256xf32> to vector<8x256xf32>
    %190 = arith.addf %187, %189 : vector<8x256xf32>
    %cst_94 = arith.constant 5.000000e-01 : f32
    %191 = vector.broadcast %cst_94 : f32 to vector<8x256xf32>
    %192 = arith.mulf %191, %190 : vector<8x256xf32>
    %cst_95 = arith.constant 0.707106769 : f32
    %193 = vector.broadcast %cst_95 : f32 to vector<8x256xf32>
    %194 = arith.mulf %190, %193 : vector<8x256xf32>
    %195 = math.erf %194 : vector<8x256xf32>
    %cst_96 = arith.constant 1.000000e+00 : f32
    %196 = vector.broadcast %cst_96 : f32 to vector<8x256xf32>
    %197 = arith.addf %196, %195 : vector<8x256xf32>
    %198 = arith.mulf %192, %197 : vector<8x256xf32>
    %199 = arith.addf %146, %198 : vector<8x256xf32>
    %200 = arith.addf %32, %199 : vector<8x256xf32>
    %201 = arith.truncf %116 : vector<8x256xf32> to vector<8x256xbf16>
    %c0_97 = arith.constant 0 : index
    %c0_98 = arith.constant 0 : index
    %202 = vector.load %arg27[%c0_97, %c0_98] : memref<256x256xbf16, #tpu.memory_space<vmem>>, vector<256x256xbf16>
    %cst_99 = arith.constant dense<0.000000e+00> : vector<8x256xf32>
    %203 = tpu.matmul %201, %202, %cst_99 {dimension_numbers = #tpu.dot_dimension_numbers<[1], [0], [0], [1], [0, 0, 1, 1], [], []>} : vector<8x256xbf16>, vector<256x256xbf16>, vector<8x256xf32> -> vector<8x256xf32>
    %c0_100 = arith.constant 0 : index
    %c0_101 = arith.constant 0 : index
    %204 = vector.load %arg28[%c0_100, %c0_101] : memref<1x256xf32, #tpu.memory_space<vmem>>, vector<1x256xf32>
    %205 = vector.broadcast %204 : vector<1x256xf32> to vector<8x256xf32>
    %206 = arith.addf %203, %205 : vector<8x256xf32>
    %cst_102 = arith.constant 0.000000e+00 : f32
    %207 = vector.broadcast %cst_102 : f32 to vector<8x256xf32>
    %208 = arith.maximumf %206, %207 : vector<8x256xf32>
    %209 = arith.truncf %200 : vector<8x256xf32> to vector<8x256xbf16>
    %c0_103 = arith.constant 0 : index
    %c0_104 = arith.constant 0 : index
    %210 = vector.load %arg29[%c0_103, %c0_104] : memref<256x256xbf16, #tpu.memory_space<vmem>>, vector<256x256xbf16>
    %cst_105 = arith.constant dense<0.000000e+00> : vector<8x256xf32>
    %211 = tpu.matmul %209, %210, %cst_105 {dimension_numbers = #tpu.dot_dimension_numbers<[1], [0], [0], [1], [0, 0, 1, 1], [], []>} : vector<8x256xbf16>, vector<256x256xbf16>, vector<8x256xf32> -> vector<8x256xf32>
    %c0_106 = arith.constant 0 : index
    %c0_107 = arith.constant 0 : index
    %212 = vector.load %arg30[%c0_106, %c0_107] : memref<1x256xf32, #tpu.memory_space<vmem>>, vector<1x256xf32>
    %213 = vector.broadcast %212 : vector<1x256xf32> to vector<8x256xf32>
    %214 = arith.addf %211, %213 : vector<8x256xf32>
    %cst_108 = arith.constant 0.000000e+00 : f32
    %215 = vector.broadcast %cst_108 : f32 to vector<8x256xf32>
    %216 = arith.maximumf %214, %215 : vector<8x256xf32>
    %217 = arith.addf %208, %216 : vector<8x256xf32>
    %218 = arith.truncf %217 : vector<8x256xf32> to vector<8x256xbf16>
    %c0_109 = arith.constant 0 : index
    %c0_110 = arith.constant 0 : index
    %219 = vector.load %arg31[%c0_109, %c0_110] : memref<256x128xbf16, #tpu.memory_space<vmem>>, vector<256x128xbf16>
    %cst_111 = arith.constant dense<0.000000e+00> : vector<8x128xf32>
    %220 = tpu.matmul %218, %219, %cst_111 {dimension_numbers = #tpu.dot_dimension_numbers<[1], [0], [0], [1], [0, 0, 1, 1], [], []>} : vector<8x256xbf16>, vector<256x128xbf16>, vector<8x128xf32> -> vector<8x128xf32>
    %c0_112 = arith.constant 0 : index
    %c0_113 = arith.constant 0 : index
    %221 = vector.load %arg32[%c0_112, %c0_113] : memref<1x128xf32, #tpu.memory_space<vmem>>, vector<1x128xf32>
    %222 = vector.broadcast %221 : vector<1x128xf32> to vector<8x128xf32>
    %223 = arith.addf %220, %222 : vector<8x128xf32>
    %c0_114 = arith.constant 0 : index
    %c0_115 = arith.constant 0 : index
    %224 = vector.load %arg33[%c0_114, %c0_115] : memref<8x128xf32, #tpu.memory_space<vmem>>, vector<8x128xf32>
    tpu.vector_store %arg33[%c0_114, %c0_115], %223 {strides = array<i32>} : memref<8x128xf32, #tpu.memory_space<vmem>>, vector<8x128xf32>,
    return
  }
  func.func @transform_0(%arg0: i32) -> (i32, i32) {
    %c0_i32 = arith.constant 0 : i32
    %c0_i32_0 = arith.constant 0 : i32
    return %arg0, %c0_i32 : i32, i32
  }
  func.func @transform_1(%arg0: i32) -> (i32, i32, i32) {
    %c0_i32 = arith.constant 0 : i32
    %c0_i32_0 = arith.constant 0 : i32
    %c0_i32_1 = arith.constant 0 : i32
    return %arg0, %c0_i32, %c0_i32_0 : i32, i32, i32
  }
  func.func @transform_2(%arg0: i32) -> i32 {
    %c0_i32 = arith.constant 0 : i32
    %c0_i32_0 = arith.constant 0 : i32
    return %c0_i32 : i32
  }
  func.func @transform_3(%arg0: i32) -> i32 {
    %c0_i32 = arith.constant 0 : i32
    %c0_i32_0 = arith.constant 0 : i32
    return %c0_i32 : i32
  }
  func.func @transform_4(%arg0: i32) -> (i32, i32) {
    %c0_i32 = arith.constant 0 : i32
    %c0_i32_0 = arith.constant 0 : i32
    %c0_i32_1 = arith.constant 0 : i32
    return %c0_i32, %c0_i32_0 : i32, i32
  }
  func.func @transform_5(%arg0: i32) -> (i32, i32) {
    %c0_i32 = arith.constant 0 : i32
    %c0_i32_0 = arith.constant 0 : i32
    %c0_i32_1 = arith.constant 0 : i32
    return %c0_i32, %c0_i32_0 : i32, i32
  }
  func.func @transform_6(%arg0: i32) -> (i32, i32) {
    %c0_i32 = arith.constant 0 : i32
    %c0_i32_0 = arith.constant 0 : i32
    %c0_i32_1 = arith.constant 0 : i32
    return %c0_i32, %c0_i32_0 : i32, i32
  }
  func.func @transform_7(%arg0: i32) -> (i32, i32) {
    %c0_i32 = arith.constant 0 : i32
    %c0_i32_0 = arith.constant 0 : i32
    %c0_i32_1 = arith.constant 0 : i32
    return %c0_i32, %c0_i32_0 : i32, i32
  }
  func.func @transform_8(%arg0: i32) -> (i32, i32) {
    %c0_i32 = arith.constant 0 : i32
    %c0_i32_0 = arith.constant 0 : i32
    %c0_i32_1 = arith.constant 0 : i32
    return %c0_i32, %c0_i32_0 : i32, i32
  }
  func.func @transform_9(%arg0: i32) -> (i32, i32) {
    %c0_i32 = arith.constant 0 : i32
    %c0_i32_0 = arith.constant 0 : i32
    %c0_i32_1 = arith.constant 0 : i32
    return %c0_i32, %c0_i32_0 : i32, i32
  }
  func.func @transform_10(%arg0: i32) -> (i32, i32) {
    %c0_i32 = arith.constant 0 : i32
    %c0_i32_0 = arith.constant 0 : i32
    %c0_i32_1 = arith.constant 0 : i32
    return %c0_i32, %c0_i32_0 : i32, i32
  }
  func.func @transform_11(%arg0: i32) -> (i32, i32) {
    %c0_i32 = arith.constant 0 : i32
    %c0_i32_0 = arith.constant 0 : i32
    %c0_i32_1 = arith.constant 0 : i32
    return %c0_i32, %c0_i32_0 : i32, i32
  }
  func.func @transform_12(%arg0: i32) -> (i32, i32) {
    %c0_i32 = arith.constant 0 : i32
    %c0_i32_0 = arith.constant 0 : i32
    %c0_i32_1 = arith.constant 0 : i32
    return %c0_i32, %c0_i32_0 : i32, i32
  }
  func.func @transform_13(%arg0: i32) -> (i32, i32) {
    %c0_i32 = arith.constant 0 : i32
    %c0_i32_0 = arith.constant 0 : i32
    %c0_i32_1 = arith.constant 0 : i32
    return %c0_i32, %c0_i32_0 : i32, i32
  }
  func.func @transform_14(%arg0: i32) -> (i32, i32) {
    %c0_i32 = arith.constant 0 : i32
    %c0_i32_0 = arith.constant 0 : i32
    %c0_i32_1 = arith.constant 0 : i32
    return %c0_i32, %c0_i32_0 : i32, i32
  }
  func.func @transform_15(%arg0: i32) -> (i32, i32) {
    %c0_i32 = arith.constant 0 : i32
    %c0_i32_0 = arith.constant 0 : i32
    %c0_i32_1 = arith.constant 0 : i32
    return %c0_i32, %c0_i32_0 : i32, i32
  }
  func.func @transform_16(%arg0: i32) -> (i32, i32) {
    %c0_i32 = arith.constant 0 : i32
    %c0_i32_0 = arith.constant 0 : i32
    %c0_i32_1 = arith.constant 0 : i32
    return %c0_i32, %c0_i32_0 : i32, i32
  }
  func.func @transform_17(%arg0: i32) -> (i32, i32) {
    %c0_i32 = arith.constant 0 : i32
    %c0_i32_0 = arith.constant 0 : i32
    %c0_i32_1 = arith.constant 0 : i32
    return %c0_i32, %c0_i32_0 : i32, i32
  }
  func.func @transform_18(%arg0: i32) -> (i32, i32) {
    %c0_i32 = arith.constant 0 : i32
    %c0_i32_0 = arith.constant 0 : i32
    %c0_i32_1 = arith.constant 0 : i32
    return %c0_i32, %c0_i32_0 : i32, i32
  }
  func.func @transform_19(%arg0: i32) -> (i32, i32) {
    %c0_i32 = arith.constant 0 : i32
    %c0_i32_0 = arith.constant 0 : i32
    %c0_i32_1 = arith.constant 0 : i32
    return %c0_i32, %c0_i32_0 : i32, i32
  }
  func.func @transform_20(%arg0: i32) -> (i32, i32) {
    %c0_i32 = arith.constant 0 : i32
    %c0_i32_0 = arith.constant 0 : i32
    %c0_i32_1 = arith.constant 0 : i32
    return %c0_i32, %c0_i32_0 : i32, i32
  }
  func.func @transform_21(%arg0: i32) -> (i32, i32) {
    %c0_i32 = arith.constant 0 : i32
    %c0_i32_0 = arith.constant 0 : i32
    %c0_i32_1 = arith.constant 0 : i32
    return %c0_i32, %c0_i32_0 : i32, i32
  }
  func.func @transform_22(%arg0: i32) -> (i32, i32) {
    %c0_i32 = arith.constant 0 : i32
    %c0_i32_0 = arith.constant 0 : i32
    %c0_i32_1 = arith.constant 0 : i32
    return %c0_i32, %c0_i32_0 : i32, i32
  }
  func.func @transform_23(%arg0: i32) -> (i32, i32) {
    %c0_i32 = arith.constant 0 : i32
    %c0_i32_0 = arith.constant 0 : i32
    %c0_i32_1 = arith.constant 0 : i32
    return %c0_i32, %c0_i32_0 : i32, i32
  }
  func.func @transform_24(%arg0: i32) -> (i32, i32) {
    %c0_i32 = arith.constant 0 : i32
    %c0_i32_0 = arith.constant 0 : i32
    %c0_i32_1 = arith.constant 0 : i32
    return %c0_i32, %c0_i32_0 : i32, i32
  }
  func.func @transform_25(%arg0: i32) -> (i32, i32) {
    %c0_i32 = arith.constant 0 : i32
    %c0_i32_0 = arith.constant 0 : i32
    %c0_i32_1 = arith.constant 0 : i32
    return %c0_i32, %c0_i32_0 : i32, i32
  }
  func.func @transform_26(%arg0: i32) -> (i32, i32) {
    %c0_i32 = arith.constant 0 : i32
    %c0_i32_0 = arith.constant 0 : i32
    %c0_i32_1 = arith.constant 0 : i32
    return %c0_i32, %c0_i32_0 : i32, i32
  }
  func.func @transform_27(%arg0: i32) -> (i32, i32) {
    %c0_i32 = arith.constant 0 : i32
    %c0_i32_0 = arith.constant 0 : i32
    %c0_i32_1 = arith.constant 0 : i32
    return %c0_i32, %c0_i32_0 : i32, i32
  }
  func.func @transform_28(%arg0: i32) -> (i32, i32) {
    %c0_i32 = arith.constant 0 : i32
    %c0_i32_0 = arith.constant 0 : i32
    %c0_i32_1 = arith.constant 0 : i32
    return %c0_i32, %c0_i32_0 : i32, i32
  }
  func.func @transform_29(%arg0: i32) -> (i32, i32) {
    %c0_i32 = arith.constant 0 : i32
    %c0_i32_0 = arith.constant 0 : i32
    %c0_i32_1 = arith.constant 0 : i32
    return %c0_i32, %c0_i32_0 : i32, i32
  }
  func.func @transform_30(%arg0: i32) -> (i32, i32) {
    %c0_i32 = arith.constant 0 : i32
    %c0_i32_0 = arith.constant 0 : i32
    %c0_i32_1 = arith.constant 0 : i32
    return %c0_i32, %c0_i32_0 : i32, i32
  }
  func.func @transform_31(%arg0: i32) -> (i32, i32) {
    %c0_i32 = arith.constant 0 : i32
    %c0_i32_0 = arith.constant 0 : i32
    %c0_i32_1 = arith.constant 0 : i32
    return %c0_i32, %c0_i32_0 : i32, i32
  }
  func.func @transform_32(%arg0: i32) -> (i32, i32) {
    %c0_i32 = arith.constant 0 : i32
    %c0_i32_0 = arith.constant 0 : i32
    return %arg0, %c0_i32 : i32, i32
  }
}

</mosaic_0001>

<llo_original>
// kernel: av_model_v3_forward.1
$region0: #{av_model_v3_forward.1}
  #allocation0 [shape = 'u32[]', space=smem, size = 0x4, offset = 0x4, fixed_abs, tag = 'smem constant byte address 0x4 - core index']
  #allocation1 [shape = 'u32[144,128]{1,0:T(1,128)}', space=vmem, size = 0x12000, scoped, tag = 'internal scratch']
  #allocation2 [shape = 'f32[1]{0:T(128)S(6)}', space=smem, size = 0x200, scoped, tag = 'scoped memory for av_model_v3_forward.1']
  %s0 = inlined_call_operand.smem [shape: u32[33], index: -1, kind: input, shape index: {}]
  %s1 = sld [smem:[%s0]]
  %s2 = scalar_lea.smem %s0, 1
  %s3 = sld [smem:[%s2]]
  %s4 = scalar_lea.smem %s0, 2
  %s5 = sld [smem:[%s4]]
  %s6 = scalar_lea.smem %s0, 3
  %s7 = sld [smem:[%s6]]
  %s8 = scalar_lea.smem %s0, 4
  %s9 = sld [smem:[%s8]]
  %s10 = scalar_lea.smem %s0, 5
  %s11 = sld [smem:[%s10]]
  %s12 = scalar_lea.smem %s0, 6
  %s13 = sld [smem:[%s12]]
  %s14 = scalar_lea.smem %s0, 7
  %s15 = sld [smem:[%s14]]
  %s16 = scalar_lea.smem %s0, 8
  %s17 = sld [smem:[%s16]]
  %s18 = scalar_lea.smem %s0, 9
  %s19 = sld [smem:[%s18]]
  %s20 = scalar_lea.smem %s0, 10
  %s21 = sld [smem:[%s20]]
  %s22 = scalar_lea.smem %s0, 11
  %s23 = sld [smem:[%s22]]
  %s24 = scalar_lea.smem %s0, 12
  %s25 = sld [smem:[%s24]]
  %s26 = scalar_lea.smem %s0, 13
  %s27 = sld [smem:[%s26]]
  %s28 = scalar_lea.smem %s0, 14
  %s29 = sld [smem:[%s28]]
  %s30 = scalar_lea.smem %s0, 15
  %s31 = sld [smem:[%s30]]
  %s32 = scalar_lea.smem %s0, 16
  %s33 = sld [smem:[%s32]]
  %s34 = scalar_lea.smem %s0, 17
  %s35 = sld [smem:[%s34]]
  %s36 = scalar_lea.smem %s0, 18
  %s37 = sld [smem:[%s36]]
  %s38 = scalar_lea.smem %s0, 19
  %s39 = sld [smem:[%s38]]
  %s40 = scalar_lea.smem %s0, 20
  %s41 = sld [smem:[%s40]]
  %s42 = scalar_lea.smem %s0, 21
  %s43 = sld [smem:[%s42]]
  %s44 = scalar_lea.smem %s0, 22
  %s45 = sld [smem:[%s44]]
  %s46 = scalar_lea.smem %s0, 23
  %s47 = sld [smem:[%s46]]
  %s48 = scalar_lea.smem %s0, 24
  %s49 = sld [smem:[%s48]]
  %s50 = scalar_lea.smem %s0, 25
  %s51 = sld [smem:[%s50]]
  %s52 = scalar_lea.smem %s0, 26
  %s53 = sld [smem:[%s52]]
  %s54 = scalar_lea.smem %s0, 27
  %s55 = sld [smem:[%s54]]
  %s56 = scalar_lea.smem %s0, 28
  %s57 = sld [smem:[%s56]]
  %s58 = scalar_lea.smem %s0, 29
  %s59 = sld [smem:[%s58]]
  %s60 = scalar_lea.smem %s0, 30
  %s61 = sld [smem:[%s60]]
  %s62 = scalar_lea.smem %s0, 31
  %s63 = sld [smem:[%s62]]
  %s64 = scalar_lea.smem %s0, 32
  %s65 = sld [smem:[%s64]]
  %s66 = sld [smem:[#allocation0]]
  $region182: #{av_model_v3_forward.1} parent=0
    _
  %s68 = ssub.s32 1, %s66
  %s69 = scalar_select 0, %s68, %s66
  %70 = sst [smem:[#allocation2]] %s7
  $region1: #{av_model_v3_forward.1} parent=0
    #allocation3 [shape = 'u8[512]{0}', space=smem, size = 0x200, scoped, tag = 'input window, operand 2, single buffered']
    #allocation4 [shape = 's32[1]{0}', space=sflag, size = 0x4, scoped, tag = 'scoped memory for av_model_v3_forward.1']
    #allocation5 [shape = 's32[1]{0}', space=sflag, size = 0x4, scoped, tag = 'scoped memory for av_model_v3_forward.1']
    #allocation6 [shape = 'u8[65536]{0}', space=vmem, size = 0x10000, scoped, tag = 'input window, operand 4, single buffered']
    #allocation7 [shape = 'u8[131072]{0}', space=vmem, size = 0x20000, scoped, tag = 'input window, operand 8, single buffered']
    #allocation8 [shape = 's32[1]{0}', space=sflag, size = 0x4, scoped, tag = 'scoped memory for av_model_v3_forward.1']
    #allocation9 [shape = 'u8[65536]{0}', space=vmem, size = 0x10000, scoped, tag = 'input window, operand 10, single buffered']
    #allocation10 [shape = 'u8[65536]{0}', space=vmem, size = 0x10000, scoped, tag = 'input window, operand 14, single buffered']
    #allocation11 [shape = 's32[1]{0}', space=sflag, size = 0x4, scoped, tag = 'scoped memory for av_model_v3_forward.1']
    #allocation12 [shape = 'u8[131072]{0}', space=vmem, size = 0x20000, scoped, tag = 'input window, operand 18, single buffered']
    #allocation13 [shape = 'u8[65536]{0}', space=vmem, size = 0x10000, scoped, tag = 'input window, operand 20, single buffered']
    #allocation14 [shape = 's32[1]{0}', space=sflag, size = 0x4, scoped, tag = 'scoped memory for av_model_v3_forward.1']
    #allocation15 [shape = 'u8[65536]{0}', space=vmem, size = 0x10000, scoped, tag = 'input window, operand 24, single buffered']
    #allocation16 [shape = 'u8[131072]{0}', space=vmem, size = 0x20000, scoped, tag = 'input window, operand 26, single buffered']
    #allocation17 [shape = 's32[1]{0}', space=sflag, size = 0x4, scoped, tag = 'scoped memory for av_model_v3_forward.1']
    #allocation18 [shape = 'u8[131072]{0}', space=vmem, size = 0x20000, scoped, tag = 'input window, operand 28, single buffered']
    #allocation19 [shape = 'u8[65536]{0}', space=vmem, size = 0x10000, scoped, tag = 'input window, operand 30, single buffered']
    #allocation20 [shape = 's32[1]{0}', space=sflag, size = 0x4, scoped, tag = 'scoped memory for av_model_v3_forward.1']
    %71 = vsyncpa [#allocation5], 0
    %72 = vsyncpa [#allocation4], 0
    %73 = vsyncpa [#allocation8], 0
    %74 = vsyncpa [#allocation11], 0
    %75 = vsyncpa [#allocation14], 0
    %76 = vsyncpa [#allocation17], 0
    %77 = vsyncpa [#allocation20], 0
    // Predicated region
    $region2: #{av_model_v3_forward.1} parent=1 // pred_check
      _
    $region3: #{av_model_v3_forward.1} parent=1 // pred_check_branch
      %79 = sbr.rel (0) target = $region5
    $region4: #{av_model_v3_forward.1} parent=1 // pred_region
      _
    $region5: #{av_model_v3_forward.1} parent=1 // pred_fallthru
      _
    // Predicated region
    $region6: #{av_model_v3_forward.1} parent=1 // pred_check
      _
    $region7: #{av_model_v3_forward.1} parent=1 // pred_check_branch
      %81 = sbr.rel (0) target = $region9
    $region8: #{av_model_v3_forward.1} parent=1 // pred_region
      _
    $region9: #{av_model_v3_forward.1} parent=1 // pred_fallthru
      _
    // Predicated region
    $region10: #{av_model_v3_forward.1} parent=1 // pred_check
      _
    $region11: #{av_model_v3_forward.1} parent=1 // pred_check_branch
      %83 = sbr.rel (0) target = $region13
    $region12: #{av_model_v3_forward.1} parent=1 // pred_region
      %s85 = ssub.s32 16, 16
      %86 = vsyncadd [#allocation5], %s85
      %s88 = sshll.u32 %s5, 4
      %s89 = int_to_ptr.vmem [resolvable:$true] %s88
      %91 = dma.vmem_to_smem %s89, 16, [#allocation3], [#allocation5]
    $region13: #{av_model_v3_forward.1} parent=1 // pred_fallthru
      _
    // Predicated region
    $region14: #{av_model_v3_forward.1} parent=1 // pred_check
      _
    $region15: #{av_model_v3_forward.1} parent=1 // pred_check_branch
      %93 = sbr.rel (0) target = $region17
    $region16: #{av_model_v3_forward.1} parent=1 // pred_region
      _
    $region17: #{av_model_v3_forward.1} parent=1 // pred_fallthru
      _
    // Predicated region
    $region18: #{av_model_v3_forward.1} parent=1 // pred_check
      _
    $region19: #{av_model_v3_forward.1} parent=1 // pred_check_branch
      %95 = sbr.rel (0) target = $region21
    $region20: #{av_model_v3_forward.1} parent=1 // pred_region
      %s97 = ssub.s32 2048, 2048
      %98 = vsyncadd [#allocation4], %s97
      %s99 = sshll.u32 [#allocation6], 4
      %s100 = int_to_ptr.vmem [resolvable:$true] %s99
      %105 = dma.hbm_to_vmem [thread:$0]  %s9, 2048, %s100, [#allocation4], 128, 128, 8
    $region21: #{av_model_v3_forward.1} parent=1 // pred_fallthru
      _
    // Predicated region
    $region22: #{av_model_v3_forward.1} parent=1 // pred_check
      _
    $region23: #{av_model_v3_forward.1} parent=1 // pred_check_branch
      %107 = sbr.rel (0) target = $region25
    $region24: #{av_model_v3_forward.1} parent=1 // pred_region
      _
    $region25: #{av_model_v3_forward.1} parent=1 // pred_fallthru
      _
    // Predicated region
    $region26: #{av_model_v3_forward.1} parent=1 // pred_check
      _
    $region27: #{av_model_v3_forward.1} parent=1 // pred_check_branch
      %109 = sbr.rel (0) target = $region29
    $region28: #{av_model_v3_forward.1} parent=1 // pred_region
      _
    $region29: #{av_model_v3_forward.1} parent=1 // pred_fallthru
      _
    // Predicated region
    $region30: #{av_model_v3_forward.1} parent=1 // pred_check
      _
    $region31: #{av_model_v3_forward.1} parent=1 // pred_check_branch
      %111 = sbr.rel (0) target = $region33
    $region32: #{av_model_v3_forward.1} parent=1 // pred_region
      _
    $region33: #{av_model_v3_forward.1} parent=1 // pred_fallthru
      _
    // Predicated region
    $region34: #{av_model_v3_forward.1} parent=1 // pred_check
      _
    $region35: #{av_model_v3_forward.1} parent=1 // pred_check_branch
      %113 = sbr.rel (0) target = $region37
    $region36: #{av_model_v3_forward.1} parent=1 // pred_region
      %s115 = ssub.s32 4096, 4096
      %116 = vsyncadd [#allocation8], %s115
      %s117 = sshll.u32 [#allocation7], 4
      %s118 = int_to_ptr.vmem [resolvable:$true] %s117
      %123 = dma.hbm_to_vmem [thread:$0]  %s17, 4096, %s118, [#allocation8], 128, 128, 8
    $region37: #{av_model_v3_forward.1} parent=1 // pred_fallthru
      _
    // Predicated region
    $region38: #{av_model_v3_forward.1} parent=1 // pred_check
      _
    $region39: #{av_model_v3_forward.1} parent=1 // pred_check_branch
      %125 = sbr.rel (0) target = $region41
    $region40: #{av_model_v3_forward.1} parent=1 // pred_region
      _
    $region41: #{av_model_v3_forward.1} parent=1 // pred_fallthru
      _
    // Predicated region
    $region42: #{av_model_v3_forward.1} parent=1 // pred_check
      _
    $region43: #{av_model_v3_forward.1} parent=1 // pred_check_branch
      %127 = sbr.rel (0) target = $region45
    $region44: #{av_model_v3_forward.1} parent=1 // pred_region
      %s129 = ssub.s32 2048, 2048
      %130 = vsyncadd [#allocation8], %s129
      %s131 = sshll.u32 [#allocation9], 4
      %s132 = int_to_ptr.vmem [resolvable:$true] %s131
      %137 = dma.hbm_to_vmem [thread:$0]  %s21, 2048, %s132, [#allocation8], 64, 64, 4
    $region45: #{av_model_v3_forward.1} parent=1 // pred_fallthru
      _
    // Predicated region
    $region46: #{av_model_v3_forward.1} parent=1 // pred_check
      _
    $region47: #{av_model_v3_forward.1} parent=1 // pred_check_branch
      %139 = sbr.rel (0) target = $region49
    $region48: #{av_model_v3_forward.1} parent=1 // pred_region
      _
    $region49: #{av_model_v3_forward.1} parent=1 // pred_fallthru
      _
    // Predicated region
    $region50: #{av_model_v3_forward.1} parent=1 // pred_check
      _
    $region51: #{av_model_v3_forward.1} parent=1 // pred_check_branch
      %141 = sbr.rel (0) target = $region53
    $region52: #{av_model_v3_forward.1} parent=1 // pred_region
      _
    $region53: #{av_model_v3_forward.1} parent=1 // pred_fallthru
      _
    // Predicated region
    $region54: #{av_model_v3_forward.1} parent=1 // pred_check
      _
    $region55: #{av_model_v3_forward.1} parent=1 // pred_check_branch
      %143 = sbr.rel (0) target = $region57
    $region56: #{av_model_v3_forward.1} parent=1 // pred_region
      _
    $region57: #{av_model_v3_forward.1} parent=1 // pred_fallthru
      _
    // Predicated region
    $region58: #{av_model_v3_forward.1} parent=1 // pred_check
      _
    $region59: #{av_model_v3_forward.1} parent=1 // pred_check_branch
      %145 = sbr.rel (0) target = $region61
    $region60: #{av_model_v3_forward.1} parent=1 // pred_region
      %s147 = ssub.s32 2048, 2048
      %148 = vsyncadd [#allocation11], %s147
      %s149 = sshll.u32 [#allocation10], 4
      %s150 = int_to_ptr.vmem [resolvable:$true] %s149
      %155 = dma.hbm_to_vmem [thread:$0]  %s29, 2048, %s150, [#allocation11], 128, 128, 8
    $region61: #{av_model_v3_forward.1} parent=1 // pred_fallthru
      _
    // Predicated region
    $region62: #{av_model_v3_forward.1} parent=1 // pred_check
      _
    $region63: #{av_model_v3_forward.1} parent=1 // pred_check_branch
      %157 = sbr.rel (0) target = $region65
    $region64: #{av_model_v3_forward.1} parent=1 // pred_region
      _
    $region65: #{av_model_v3_forward.1} parent=1 // pred_fallthru
      _
    // Predicated region
    $region66: #{av_model_v3_forward.1} parent=1 // pred_check
      _
    $region67: #{av_model_v3_forward.1} parent=1 // pred_check_branch
      %159 = sbr.rel (0) target = $region69
    $region68: #{av_model_v3_forward.1} parent=1 // pred_region
      _
    $region69: #{av_model_v3_forward.1} parent=1 // pred_fallthru
      _
    // Predicated region
    $region70: #{av_model_v3_forward.1} parent=1 // pred_check
      _
    $region71: #{av_model_v3_forward.1} parent=1 // pred_check_branch
      %161 = sbr.rel (0) target = $region73
    $region72: #{av_model_v3_forward.1} parent=1 // pred_region
      _
    $region73: #{av_model_v3_forward.1} parent=1 // pred_fallthru
      _
    // Predicated region
    $region74: #{av_model_v3_forward.1} parent=1 // pred_check
      _
    $region75: #{av_model_v3_forward.1} parent=1 // pred_check_branch
      %163 = sbr.rel (0) target = $region77
    $region76: #{av_model_v3_forward.1} parent=1 // pred_region
      %s165 = ssub.s32 4096, 4096
      %166 = vsyncadd [#allocation11], %s165
      %s167 = sshll.u32 [#allocation12], 4
      %s168 = int_to_ptr.vmem [resolvable:$true] %s167
      %173 = dma.hbm_to_vmem [thread:$0]  %s37, 4096, %s168, [#allocation11], 128, 128, 8
    $region77: #{av_model_v3_forward.1} parent=1 // pred_fallthru
      _
    // Predicated region
    $region78: #{av_model_v3_forward.1} parent=1 // pred_check
      _
    $region79: #{av_model_v3_forward.1} parent=1 // pred_check_branch
      %175 = sbr.rel (0) target = $region81
    $region80: #{av_model_v3_forward.1} parent=1 // pred_region
      _
    $region81: #{av_model_v3_forward.1} parent=1 // pred_fallthru
      _
    // Predicated region
    $region82: #{av_model_v3_forward.1} parent=1 // pred_check
      _
    $region83: #{av_model_v3_forward.1} parent=1 // pred_check_branch
      %177 = sbr.rel (0) target = $region85
    $region84: #{av_model_v3_forward.1} parent=1 // pred_region
      %s179 = ssub.s32 2048, 2048
      %180 = vsyncadd [#allocation14], %s179
      %s181 = sshll.u32 [#allocation13], 4
      %s182 = int_to_ptr.vmem [resolvable:$true] %s181
      %187 = dma.hbm_to_vmem [thread:$0]  %s41, 2048, %s182, [#allocation14], 64, 64, 4
    $region85: #{av_model_v3_forward.1} parent=1 // pred_fallthru
      _
    // Predicated region
    $region86: #{av_model_v3_forward.1} parent=1 // pred_check
      _
    $region87: #{av_model_v3_forward.1} parent=1 // pred_check_branch
      %189 = sbr.rel (0) target = $region89
    $region88: #{av_model_v3_forward.1} parent=1 // pred_region
      _
    $region89: #{av_model_v3_forward.1} parent=1 // pred_fallthru
      _
    // Predicated region
    $region90: #{av_model_v3_forward.1} parent=1 // pred_check
      _
    $region91: #{av_model_v3_forward.1} parent=1 // pred_check_branch
      %191 = sbr.rel (0) target = $region93
    $region92: #{av_model_v3_forward.1} parent=1 // pred_region
      _
    $region93: #{av_model_v3_forward.1} parent=1 // pred_fallthru
      _
    // Predicated region
    $region94: #{av_model_v3_forward.1} parent=1 // pred_check
      _
    $region95: #{av_model_v3_forward.1} parent=1 // pred_check_branch
      %193 = sbr.rel (0) target = $region97
    $region96: #{av_model_v3_forward.1} parent=1 // pred_region
      _
    $region97: #{av_model_v3_forward.1} parent=1 // pred_fallthru
      _
    // Predicated region
    $region98: #{av_model_v3_forward.1} parent=1 // pred_check
      _
    $region99: #{av_model_v3_forward.1} parent=1 // pred_check_branch
      %195 = sbr.rel (0) target = $region101
    $region100: #{av_model_v3_forward.1} parent=1 // pred_region
      %s197 = ssub.s32 2048, 2048
      %198 = vsyncadd [#allocation14], %s197
      %s199 = sshll.u32 [#allocation15], 4
      %s200 = int_to_ptr.vmem [resolvable:$true] %s199
      %205 = dma.hbm_to_vmem [thread:$0]  %s49, 2048, %s200, [#allocation14], 128, 128, 8
    $region101: #{av_model_v3_forward.1} parent=1 // pred_fallthru
      _
    // Predicated region
    $region102: #{av_model_v3_forward.1} parent=1 // pred_check
      _
    $region103: #{av_model_v3_forward.1} parent=1 // pred_check_branch
      %207 = sbr.rel (0) target = $region105
    $region104: #{av_model_v3_forward.1} parent=1 // pred_region
      _
    $region105: #{av_model_v3_forward.1} parent=1 // pred_fallthru
      _
    // Predicated region
    $region106: #{av_model_v3_forward.1} parent=1 // pred_check
      _
    $region107: #{av_model_v3_forward.1} parent=1 // pred_check_branch
      %209 = sbr.rel (0) target = $region109
    $region108: #{av_model_v3_forward.1} parent=1 // pred_region
      %s211 = ssub.s32 4096, 4096
      %212 = vsyncadd [#allocation17], %s211
      %s213 = sshll.u32 [#allocation16], 4
      %s214 = int_to_ptr.vmem [resolvable:$true] %s213
      %219 = dma.hbm_to_vmem [thread:$0]  %s53, 4096, %s214, [#allocation17], 128, 128, 8
    $region109: #{av_model_v3_forward.1} parent=1 // pred_fallthru
      _
    // Predicated region
    $region110: #{av_model_v3_forward.1} parent=1 // pred_check
      _
    $region111: #{av_model_v3_forward.1} parent=1 // pred_check_branch
      %221 = sbr.rel (0) target = $region113
    $region112: #{av_model_v3_forward.1} parent=1 // pred_region
      _
    $region113: #{av_model_v3_forward.1} parent=1 // pred_fallthru
      _
    // Predicated region
    $region114: #{av_model_v3_forward.1} parent=1 // pred_check
      _
    $region115: #{av_model_v3_forward.1} parent=1 // pred_check_branch
      %223 = sbr.rel (0) target = $region117
    $region116: #{av_model_v3_forward.1} parent=1 // pred_region
      %s225 = ssub.s32 4096, 4096
      %226 = vsyncadd [#allocation17], %s225
      %s227 = sshll.u32 [#allocation18], 4
      %s228 = int_to_ptr.vmem [resolvable:$true] %s227
      %233 = dma.hbm_to_vmem [thread:$0]  %s57, 4096, %s228, [#allocation17], 128, 128, 8
    $region117: #{av_model_v3_forward.1} parent=1 // pred_fallthru
      _
    // Predicated region
    $region118: #{av_model_v3_forward.1} parent=1 // pred_check
      _
    $region119: #{av_model_v3_forward.1} parent=1 // pred_check_branch
      %235 = sbr.rel (0) target = $region121
    $region120: #{av_model_v3_forward.1} parent=1 // pred_region
      _
    $region121: #{av_model_v3_forward.1} parent=1 // pred_fallthru
      _
    // Predicated region
    $region122: #{av_model_v3_forward.1} parent=1 // pred_check
      _
    $region123: #{av_model_v3_forward.1} parent=1 // pred_check_branch
      %237 = sbr.rel (0) target = $region125
    $region124: #{av_model_v3_forward.1} parent=1 // pred_region
      %s239 = ssub.s32 2048, 2048
      %240 = vsyncadd [#allocation20], %s239
      %s241 = sshll.u32 [#allocation19], 4
      %s242 = int_to_ptr.vmem [resolvable:$true] %s241
      %247 = dma.hbm_to_vmem [thread:$0]  %s61, 2048, %s242, [#allocation20], 64, 64, 4
    $region125: #{av_model_v3_forward.1} parent=1 // pred_fallthru
      _
    // Predicated region
    $region126: #{av_model_v3_forward.1} parent=1 // pred_check
      _
    $region127: #{av_model_v3_forward.1} parent=1 // pred_check_branch
      %249 = sbr.rel (0) target = $region129
    $region128: #{av_model_v3_forward.1} parent=1 // pred_region
      _
    $region129: #{av_model_v3_forward.1} parent=1 // pred_fallthru
      _
    // Predicated region
    $region130: #{av_model_v3_forward.1} parent=1 // pred_check
      _
    $region131: #{av_model_v3_forward.1} parent=1 // pred_check_branch
      %251 = sbr.rel (0) target = $region133
    $region132: #{av_model_v3_forward.1} parent=1 // pred_region
      %252 = dma.done [#allocation5], 16
    $region133: #{av_model_v3_forward.1} parent=1 // pred_fallthru
      _
    // Predicated region
    $region134: #{av_model_v3_forward.1} parent=1 // pred_check
      _
    $region135: #{av_model_v3_forward.1} parent=1 // pred_check_branch
      %254 = sbr.rel (0) target = $region137
    $region136: #{av_model_v3_forward.1} parent=1 // pred_region
      %255 = dma.done [#allocation4], 2048
    $region137: #{av_model_v3_forward.1} parent=1 // pred_fallthru
      _
    // Predicated region
    $region138: #{av_model_v3_forward.1} parent=1 // pred_check
      _
    $region139: #{av_model_v3_forward.1} parent=1 // pred_check_branch
      %257 = sbr.rel (0) target = $region141
    $region140: #{av_model_v3_forward.1} parent=1 // pred_region
      %258 = dma.done [#allocation8], 4096
    $region141: #{av_model_v3_forward.1} parent=1 // pred_fallthru
      _
    // Predicated region
    $region142: #{av_model_v3_forward.1} parent=1 // pred_check
      _
    $region143: #{av_model_v3_forward.1} parent=1 // pred_check_branch
      %260 = sbr.rel (0) target = $region145
    $region144: #{av_model_v3_forward.1} parent=1 // pred_region
      %261 = dma.done [#allocation8], 2048
    $region145: #{av_model_v3_forward.1} parent=1 // pred_fallthru
      _
    // Predicated region
    $region146: #{av_model_v3_forward.1} parent=1 // pred_check
      _
    $region147: #{av_model_v3_forward.1} parent=1 // pred_check_branch
      %263 = sbr.rel (0) target = $region149
    $region148: #{av_model_v3_forward.1} parent=1 // pred_region
      %264 = dma.done [#allocation11], 2048
    $region149: #{av_model_v3_forward.1} parent=1 // pred_fallthru
      _
    // Predicated region
    $region150: #{av_model_v3_forward.1} parent=1 // pred_check
      _
    $region151: #{av_model_v3_forward.1} parent=1 // pred_check_branch
      %266 = sbr.rel (0) target = $region153
    $region152: #{av_model_v3_forward.1} parent=1 // pred_region
      %267 = dma.done [#allocation11], 4096
    $region153: #{av_model_v3_forward.1} parent=1 // pred_fallthru
      _
    // Predicated region
    $region154: #{av_model_v3_forward.1} parent=1 // pred_check
      _
    $region155: #{av_model_v3_forward.1} parent=1 // pred_check_branch
      %269 = sbr.rel (0) target = $region157
    $region156: #{av_model_v3_forward.1} parent=1 // pred_region
      %270 = dma.done [#allocation14], 2048
    $region157: #{av_model_v3_forward.1} parent=1 // pred_fallthru
      _
    // Predicated region
    $region158: #{av_model_v3_forward.1} parent=1 // pred_check
      _
    $region159: #{av_model_v3_forward.1} parent=1 // pred_check_branch
      %272 = sbr.rel (0) target = $region161
    $region160: #{av_model_v3_forward.1} parent=1 // pred_region
      %273 = dma.done [#allocation14], 2048
    $region161: #{av_model_v3_forward.1} parent=1 // pred_fallthru
      _
    // Predicated region
    $region162: #{av_model_v3_forward.1} parent=1 // pred_check
      _
    $region163: #{av_model_v3_forward.1} parent=1 // pred_check_branch
      %275 = sbr.rel (0) target = $region165
    $region164: #{av_model_v3_forward.1} parent=1 // pred_region
      %276 = dma.done [#allocation17], 4096
    $region165: #{av_model_v3_forward.1} parent=1 // pred_fallthru
      _
    // Predicated region
    $region166: #{av_model_v3_forward.1} parent=1 // pred_check
      _
    $region167: #{av_model_v3_forward.1} parent=1 // pred_check_branch
      %278 = sbr.rel (0) target = $region169
    $region168: #{av_model_v3_forward.1} parent=1 // pred_region
      %279 = dma.done [#allocation17], 4096
    $region169: #{av_model_v3_forward.1} parent=1 // pred_fallthru
      _
    // Predicated region
    $region170: #{av_model_v3_forward.1} parent=1 // pred_check
      _
    $region171: #{av_model_v3_forward.1} parent=1 // pred_check_branch
      %281 = sbr.rel (0) target = $region173
    $region172: #{av_model_v3_forward.1} parent=1 // pred_region
      %282 = dma.done [#allocation20], 2048
    $region173: #{av_model_v3_forward.1} parent=1 // pred_fallthru
      _
    %283 = sfence
    %v285 = vld [vmem:[%s1] sm:$0xff]
    %v286 = vld [vmem:[%s1 + $0x8] sm:$0xff]
    %v287 = vld [vmem:[%s3] sm:$0x1]
    %v288 = vld [vmem:[%s3 + $0x4] sm:$0x1]
    %v289 = vld [vmem:[%s3 + $0x8] sm:$0x1]
    %v290 = vld [vmem:[%s3 + $0xc] sm:$0x1]
    %v291 = vld [vmem:[%s3 + $0x10] sm:$0x1]
    %v292 = vld [vmem:[%s3 + $0x14] sm:$0x1]
    %v293 = vld [vmem:[%s3 + $0x18] sm:$0x1]
    %v294 = vld [vmem:[%s3 + $0x1c] sm:$0x1]
    %s295 = sld [smem:[#allocation3]]
    %v296 = vstv %s295
    %v297 = vmul.f32 %v287, %v296
    %v298 = vmul.f32 %v288, %v296
    %v299 = vmul.f32 %v289, %v296
    %v300 = vmul.f32 %v290, %v296
    %v301 = vmul.f32 %v291, %v296
    %v302 = vmul.f32 %v292, %v296
    %v303 = vmul.f32 %v293, %v296
    %v304 = vmul.f32 %v294, %v296
    %v305 = vld [vmem:[%s3 + $0x1] sm:$0x1]
    %v306 = vld [vmem:[%s3 + $0x5] sm:$0x1]
    %v307 = vld [vmem:[%s3 + $0x9] sm:$0x1]
    %v308 = vld [vmem:[%s3 + $0xd] sm:$0x1]
    %v309 = vld [vmem:[%s3 + $0x11] sm:$0x1]
    %v310 = vld [vmem:[%s3 + $0x15] sm:$0x1]
    %v311 = vld [vmem:[%s3 + $0x19] sm:$0x1]
    %v312 = vld [vmem:[%s3 + $0x1d] sm:$0x1]
    %s313 = sld [smem:[#allocation3 + $0x1]]
    %v314 = vstv %s313
    %v315 = vmul.f32 %v305, %v314
    %v316 = vmul.f32 %v306, %v314
    %v317 = vmul.f32 %v307, %v314
    %v318 = vmul.f32 %v308, %v314
    %v319 = vmul.f32 %v309, %v314
    %v320 = vmul.f32 %v310, %v314
    %v321 = vmul.f32 %v311, %v314
    %v322 = vmul.f32 %v312, %v314
    %v323 = vadd.f32 %v297, %v315
    %v324 = vadd.f32 %v298, %v316
    %v325 = vadd.f32 %v299, %v317
    %v326 = vadd.f32 %v300, %v318
    %v327 = vadd.f32 %v301, %v319
    %v328 = vadd.f32 %v302, %v320
    %v329 = vadd.f32 %v303, %v321
    %v330 = vadd.f32 %v304, %v322
    %v331 = vld [vmem:[%s3 + $0x2] sm:$0x1]
    %v332 = vld [vmem:[%s3 + $0x6] sm:$0x1]
    %v333 = vld [vmem:[%s3 + $0xa] sm:$0x1]
    %v334 = vld [vmem:[%s3 + $0xe] sm:$0x1]
    %v335 = vld [vmem:[%s3 + $0x12] sm:$0x1]
    %v336 = vld [vmem:[%s3 + $0x16] sm:$0x1]
    %v337 = vld [vmem:[%s3 + $0x1a] sm:$0x1]
    %v338 = vld [vmem:[%s3 + $0x1e] sm:$0x1]
    %s339 = sld [smem:[#allocation3 + $0x2]]
    %v340 = vstv %s339
    %v341 = vmul.f32 %v331, %v340
    %v342 = vmul.f32 %v332, %v340
    %v343 = vmul.f32 %v333, %v340
    %v344 = vmul.f32 %v334, %v340
    %v345 = vmul.f32 %v335, %v340
    %v346 = vmul.f32 %v336, %v340
    %v347 = vmul.f32 %v337, %v340
    %v348 = vmul.f32 %v338, %v340
    %v349 = vadd.f32 %v323, %v341
    %v350 = vadd.f32 %v324, %v342
    %v351 = vadd.f32 %v325, %v343
    %v352 = vadd.f32 %v326, %v344
    %v353 = vadd.f32 %v327, %v345
    %v354 = vadd.f32 %v328, %v346
    %v355 = vadd.f32 %v329, %v347
    %v356 = vadd.f32 %v330, %v348
    %v357 = vld [vmem:[%s3 + $0x3] sm:$0x1]
    %v358 = vld [vmem:[%s3 + $0x7] sm:$0x1]
    %v359 = vld [vmem:[%s3 + $0xb] sm:$0x1]
    %v360 = vld [vmem:[%s3 + $0xf] sm:$0x1]
    %v361 = vld [vmem:[%s3 + $0x13] sm:$0x1]
    %v362 = vld [vmem:[%s3 + $0x17] sm:$0x1]
    %v363 = vld [vmem:[%s3 + $0x1b] sm:$0x1]
    %v364 = vld [vmem:[%s3 + $0x1f] sm:$0x1]
    %s365 = sld [smem:[#allocation3 + $0x3]]
    %v366 = vstv %s365
    %v367 = vmul.f32 %v357, %v366
    %v368 = vmul.f32 %v358, %v366
    %v369 = vmul.f32 %v359, %v366
    %v370 = vmul.f32 %v360, %v366
    %v371 = vmul.f32 %v361, %v366
    %v372 = vmul.f32 %v362, %v366
    %v373 = vmul.f32 %v363, %v366
    %v374 = vmul.f32 %v364, %v366
    %v375 = vadd.f32 %v349, %v367
    %v376 = vadd.f32 %v350, %v368
    %v377 = vadd.f32 %v351, %v369
    %v378 = vadd.f32 %v352, %v370
    %v379 = vadd.f32 %v353, %v371
    %v380 = vadd.f32 %v354, %v372
    %v381 = vadd.f32 %v355, %v373
    %v382 = vadd.f32 %v356, %v374
    %s383 = sld [smem:[#allocation2]]
    %v384 = vstv %s383
    %v385 = vadd.f32 %v375, %v384
    %v386 = vadd.f32 %v376, %v384
    %v387 = vadd.f32 %v377, %v384
    %v388 = vadd.f32 %v378, %v384
    %v389 = vadd.f32 %v379, %v384
    %v390 = vadd.f32 %v380, %v384
    %v391 = vadd.f32 %v381, %v384
    %v392 = vadd.f32 %v382, %v384
    %v393 = vpack.c.bf16 %v385, %v385
    %v394 = vpack.c.bf16 %v386, %v386
    %v395 = vpack.c.bf16 %v387, %v387
    %v396 = vpack.c.bf16 %v388, %v388
    %v397 = vpack.c.bf16 %v389, %v389
    %v398 = vpack.c.bf16 %v390, %v390
    %v399 = vpack.c.bf16 %v391, %v391
    %v400 = vpack.c.bf16 %v392, %v392
    %v401 = vld [vmem:[#allocation6] sm:$0xff]
    %v402 = vld [vmem:[#allocation6 + $0x8] sm:$0xff]
    %v403 = vld [vmem:[#allocation6 + $0x10] sm:$0xff]
    %v404 = vld [vmem:[#allocation6 + $0x18] sm:$0xff]
    %v405 = vld [vmem:[#allocation6 + $0x20] sm:$0xff]
    %v406 = vld [vmem:[#allocation6 + $0x28] sm:$0xff]
    %v407 = vld [vmem:[#allocation6 + $0x30] sm:$0xff]
    %v408 = vld [vmem:[#allocation6 + $0x38] sm:$0xff]
    %v409 = vld [vmem:[#allocation6 + $0x40] sm:$0xff]
    %v410 = vld [vmem:[#allocation6 + $0x48] sm:$0xff]
    %v411 = vld [vmem:[#allocation6 + $0x50] sm:$0xff]
    %v412 = vld [vmem:[#allocation6 + $0x58] sm:$0xff]
    %v413 = vld [vmem:[#allocation6 + $0x60] sm:$0xff]
    %v414 = vld [vmem:[#allocation6 + $0x68] sm:$0xff]
    %v415 = vld [vmem:[#allocation6 + $0x70] sm:$0xff]
    %v416 = vld [vmem:[#allocation6 + $0x78] sm:$0xff]
    %v417 = vld [vmem:[%s11] sm:$0x3]
    %v419 = vlaneseq
    %v420 = vshrl.u32 %v419, 7
    %v421 = vsub.s32 0, %v420
    %v422 = vrot.slane %v417, %v421
    %v423 = vlaneseq
    %v424 = vshrl.u32 %v423, 7
    %v425 = vsub.s32 1, %v424
    %v426 = vrot.slane %v417, %v425
    %v437 = vunpack.c.l.b16 %v393
    %v438 = vunpack.c.l.b16 %v394
    %v439 = vunpack.c.l.b16 %v395
    %v440 = vunpack.c.l.b16 %v396
    %v441 = vunpack.c.l.b16 %v397
    %v442 = vunpack.c.l.b16 %v398
    %v443 = vunpack.c.l.b16 %v399
    %v444 = vunpack.c.l.b16 %v400
    %v445 = vrot.slane %v438, 7
    %vm446 = vcmask 1041409
    %v447 = vsel %vm446, %v445, %v437
    %v448 = vrot.slane %v439, 6
    %vm449 = vcmask 1042434
    %v450 = vsel %vm449, %v448, %v447
    %v451 = vrot.slane %v440, 5
    %vm452 = vcmask 1043459
    %v453 = vsel %vm452, %v451, %v450
    %v454 = vrot.slane %v441, 4
    %vm455 = vcmask 1044484
    %v456 = vsel %vm455, %v454, %v453
    %v457 = vrot.slane %v442, 3
    %vm458 = vcmask 1045509
    %v459 = vsel %vm458, %v457, %v456
    %v460 = vrot.slane %v443, 2
    %vm461 = vcmask 1046534
    %v462 = vsel %vm461, %v460, %v459
    %v463 = vrot.slane %v444, 1
    %vm464 = vcmask 1047559
    %v465 = vsel %vm464, %v463, %v462
    %v466 = vpack.c.b16 %v465, %v465
    %v484 = vunpack.c.l.b16 %v401
    %v485 = vunpack.c.h.b16 %v401
    %v486 = vunpack.c.l.b16 %v402
    %v487 = vunpack.c.h.b16 %v402
    %v488 = vunpack.c.l.b16 %v403
    %v489 = vunpack.c.h.b16 %v403
    %v490 = vunpack.c.l.b16 %v404
    %v491 = vunpack.c.h.b16 %v404
    %v492 = vunpack.c.l.b16 %v405
    %v493 = vunpack.c.h.b16 %v405
    %v494 = vunpack.c.l.b16 %v406
    %v495 = vunpack.c.h.b16 %v406
    %v496 = vunpack.c.l.b16 %v407
    %v497 = vunpack.c.h.b16 %v407
    %v498 = vunpack.c.l.b16 %v408
    %v499 = vunpack.c.h.b16 %v408
    %v500 = vunpack.c.l.b16 %v409
    %v501 = vunpack.c.h.b16 %v409
    %v502 = vunpack.c.l.b16 %v410
    %v503 = vunpack.c.h.b16 %v410
    %v504 = vunpack.c.l.b16 %v411
    %v505 = vunpack.c.h.b16 %v411
    %v506 = vunpack.c.l.b16 %v412
    %v507 = vunpack.c.h.b16 %v412
    %v508 = vunpack.c.l.b16 %v413
    %v509 = vunpack.c.h.b16 %v413
    %v510 = vunpack.c.l.b16 %v414
    %v511 = vunpack.c.h.b16 %v414
    %v512 = vunpack.c.l.b16 %v415
    %v513 = vunpack.c.h.b16 %v415
    %v514 = vunpack.c.l.b16 %v416
    %v515 = vunpack.c.h.b16 %v416
    %v516 = vpack.c.b16 %v486, %v484
    %v517 = vpack.c.b16 %v487, %v485
    %v518 = vpack.c.b16 %v490, %v488
    %v519 = vpack.c.b16 %v491, %v489
    %v520 = vpack.c.b16 %v494, %v492
    %v521 = vpack.c.b16 %v495, %v493
    %v522 = vpack.c.b16 %v498, %v496
    %v523 = vpack.c.b16 %v499, %v497
    %v524 = vpack.c.b16 %v502, %v500
    %v525 = vpack.c.b16 %v503, %v501
    %v526 = vpack.c.b16 %v506, %v504
    %v527 = vpack.c.b16 %v507, %v505
    %v528 = vpack.c.b16 %v510, %v508
    %v529 = vpack.c.b16 %v511, %v509
    %v530 = vpack.c.b16 %v514, %v512
    %v531 = vpack.c.b16 %v515, %v513
    %548 = vmatprep.subr.bf16.mxu0 %v531
    %549 = vmatpush1.bf16.msra.mxu0 %v530
    %550 = vmatprep.subr.bf16.mxu0 %v529
    %551 = vmatpush1.bf16.msra.mxu0 %v528
    %552 = vmatprep.subr.bf16.mxu0 %v527
    %553 = vmatpush1.bf16.msra.mxu0 %v526
    %554 = vmatprep.subr.bf16.mxu0 %v525
    %555 = vmatpush1.bf16.msra.mxu0 %v524
    %556 = vmatprep.subr.bf16.mxu0 %v523
    %557 = vmatpush1.bf16.msra.mxu0 %v522
    %558 = vmatprep.subr.bf16.mxu0 %v521
    %559 = vmatpush1.bf16.msra.mxu0 %v520
    %560 = vmatprep.subr.bf16.mxu0 %v519
    %561 = vmatpush1.bf16.msra.mxu0 %v518
    %562 = vmatprep.subr.bf16.mxu0 %v517
    %563 = vmatpush1.bf16.msra.mxu0 %v516
    %564 = vmatprep.subr.bf16.mxu0 0
    %565 = vmatpush2.bf16.msra.mxu0 0
    %566 = vmatprep.subr.bf16.mxu0 0
    %567 = vmatpush2.bf16.msra.mxu0 0
    %568 = vmatprep.subr.bf16.mxu0 0
    %569 = vmatpush2.bf16.msra.mxu0 0
    %570 = vmatprep.subr.bf16.mxu0 0
    %571 = vmatpush2.bf16.msra.mxu0 0
    %572 = vmatprep.subr.bf16.mxu0 0
    %573 = vmatpush2.bf16.msra.mxu0 0
    %574 = vmatprep.subr.bf16.mxu0 0
    %575 = vmatpush2.bf16.msra.mxu0 0
    %576 = vmatprep.subr.bf16.mxu0 0
    %577 = vmatpush2.bf16.msra.mxu0 0
    %578 = vmatprep.subr.bf16.mxu0 0
    %579 = vmatpush2.bf16.msra.mxu0 0
    %580 = vmatprep.mubr.bf16.mxu0 0
    %581 = vmatmul.mubr.bf16.gmra.mxu0 %v466
    %v582 = vpop.f32.mrf.mxu0
    %v583 = vadd.f32 %v422, %v582
    %v584 = vpop.f32.mrf.mxu0
    %v585 = vadd.f32 %v426, %v584
    %v586 = vpop.f32.mrf.mxu0
    %v587 = vpop.f32.mrf.mxu0
    %588 = vdwg.mxu0
    %v589 = vld [vmem:[%s13] sm:$0x3]
    %v590 = vld [vmem:[%s15] sm:$0x3]
    %v591 = vadd.f32 %v583, %v585
    %592 = vadd.xlane.f32.xlu0 %v591
    %v593 = vpop.xlane.xlu0 %592
    %v594 = vrcp.pop 256.0
    %v595 = vmul.f32 %v593, %v594
    %v596 = vsub.f32 %v583, %v595
    %v597 = vsub.f32 %v585, %v595
    %v598 = vmul.f32 %v596, %v596
    %v599 = vmul.f32 %v597, %v597
    %v600 = vadd.f32 %v598, %v599
    %601 = vadd.xlane.f32.xlu0 %v600
    %v602 = vpop.xlane.xlu0 %601
    %v603 = vmul.f32 %v602, %v594
    %v604 = vadd.f32 %v603, 1e-05
    %v605 = vrsqrt.pop %v604
    %v606 = vmul.f32 %v596, %v605
    %v607 = vmul.f32 %v597, %v605
    %v609 = vlaneseq
    %v610 = vshrl.u32 %v609, 7
    %v611 = vsub.s32 0, %v610
    %v612 = vrot.slane %v589, %v611
    %v613 = vlaneseq
    %v614 = vshrl.u32 %v613, 7
    %v615 = vsub.s32 1, %v614
    %v616 = vrot.slane %v589, %v615
    %v619 = vmul.f32 %v606, %v612
    %v620 = vmul.f32 %v607, %v616
    %v622 = vlaneseq
    %v623 = vshrl.u32 %v622, 7
    %v624 = vsub.s32 0, %v623
    %v625 = vrot.slane %v590, %v624
    %v626 = vlaneseq
    %v627 = vshrl.u32 %v626, 7
    %v628 = vsub.s32 1, %v627
    %v629 = vrot.slane %v590, %v628
    %v632 = vadd.f32 %v619, %v625
    %v633 = vadd.f32 %v620, %v629
    %v634 = vpack.c.bf16 %v632, %v632
    %v635 = vpack.c.bf16 %v633, %v633
    %v636 = vld [vmem:[#allocation7] sm:$0xff]
    %v637 = vld [vmem:[#allocation7 + $0x8] sm:$0xff]
    %v638 = vld [vmem:[#allocation7 + $0x10] sm:$0xff]
    %v639 = vld [vmem:[#allocation7 + $0x18] sm:$0xff]
    %v640 = vld [vmem:[#allocation7 + $0x20] sm:$0xff]
    %v641 = vld [vmem:[#allocation7 + $0x28] sm:$0xff]
    %v642 = vld [vmem:[#allocation7 + $0x30] sm:$0xff]
    %v643 = vld [vmem:[#allocation7 + $0x38] sm:$0xff]
    %v644 = vld [vmem:[#allocation7 + $0x40] sm:$0xff]
    %v645 = vld [vmem:[#allocation7 + $0x48] sm:$0xff]
    %v646 = vld [vmem:[#allocation7 + $0x50] sm:$0xff]
    %v647 = vld [vmem:[#allocation7 + $0x58] sm:$0xff]
    %v648 = vld [vmem:[#allocation7 + $0x60] sm:$0xff]
    %v649 = vld [vmem:[#allocation7 + $0x68] sm:$0xff]
    %v650 = vld [vmem:[#allocation7 + $0x70] sm:$0xff]
    %v651 = vld [vmem:[#allocation7 + $0x78] sm:$0xff]
    %v652 = vld [vmem:[#allocation7 + $0x80] sm:$0xff]
    %v653 = vld [vmem:[#allocation7 + $0x88] sm:$0xff]
    %v654 = vld [vmem:[#allocation7 + $0x90] sm:$0xff]
    %v655 = vld [vmem:[#allocation7 + $0x98] sm:$0xff]
    %v656 = vld [vmem:[#allocation7 + $0xa0] sm:$0xff]
    %v657 = vld [vmem:[#allocation7 + $0xa8] sm:$0xff]
    %v658 = vld [vmem:[#allocation7 + $0xb0] sm:$0xff]
    %v659 = vld [vmem:[#allocation7 + $0xb8] sm:$0xff]
    %v660 = vld [vmem:[#allocation7 + $0xc0] sm:$0xff]
    %v661 = vld [vmem:[#allocation7 + $0xc8] sm:$0xff]
    %v662 = vld [vmem:[#allocation7 + $0xd0] sm:$0xff]
    %v663 = vld [vmem:[#allocation7 + $0xd8] sm:$0xff]
    %v664 = vld [vmem:[#allocation7 + $0xe0] sm:$0xff]
    %v665 = vld [vmem:[#allocation7 + $0xe8] sm:$0xff]
    %v666 = vld [vmem:[#allocation7 + $0xf0] sm:$0xff]
    %v667 = vld [vmem:[#allocation7 + $0xf8] sm:$0xff]
    %v668 = vld [vmem:[%s19] sm:$0x3]
    %v670 = vlaneseq
    %v671 = vshrl.u32 %v670, 7
    %v672 = vsub.s32 0, %v671
    %v673 = vrot.slane %v668, %v672
    %v674 = vlaneseq
    %v675 = vshrl.u32 %v674, 7
    %v676 = vsub.s32 1, %v675
    %v677 = vrot.slane %v668, %v676
    %v712 = vunpack.c.l.b16 %v636
    %v713 = vunpack.c.h.b16 %v636
    %v714 = vunpack.c.l.b16 %v637
    %v715 = vunpack.c.h.b16 %v637
    %v716 = vunpack.c.l.b16 %v638
    %v717 = vunpack.c.h.b16 %v638
    %v718 = vunpack.c.l.b16 %v639
    %v719 = vunpack.c.h.b16 %v639
    %v720 = vunpack.c.l.b16 %v640
    %v721 = vunpack.c.h.b16 %v640
    %v722 = vunpack.c.l.b16 %v641
    %v723 = vunpack.c.h.b16 %v641
    %v724 = vunpack.c.l.b16 %v642
    %v725 = vunpack.c.h.b16 %v642
    %v726 = vunpack.c.l.b16 %v643
    %v727 = vunpack.c.h.b16 %v643
    %v728 = vunpack.c.l.b16 %v644
    %v729 = vunpack.c.h.b16 %v644
    %v730 = vunpack.c.l.b16 %v645
    %v731 = vunpack.c.h.b16 %v645
    %v732 = vunpack.c.l.b16 %v646
    %v733 = vunpack.c.h.b16 %v646
    %v734 = vunpack.c.l.b16 %v647
    %v735 = vunpack.c.h.b16 %v647
    %v736 = vunpack.c.l.b16 %v648
    %v737 = vunpack.c.h.b16 %v648
    %v738 = vunpack.c.l.b16 %v649
    %v739 = vunpack.c.h.b16 %v649
    %v740 = vunpack.c.l.b16 %v650
    %v741 = vunpack.c.h.b16 %v650
    %v742 = vunpack.c.l.b16 %v651
    %v743 = vunpack.c.h.b16 %v651
    %v744 = vunpack.c.l.b16 %v652
    %v745 = vunpack.c.h.b16 %v652
    %v746 = vunpack.c.l.b16 %v653
    %v747 = vunpack.c.h.b16 %v653
    %v748 = vunpack.c.l.b16 %v654
    %v749 = vunpack.c.h.b16 %v654
    %v750 = vunpack.c.l.b16 %v655
    %v751 = vunpack.c.h.b16 %v655
    %v752 = vunpack.c.l.b16 %v656
    %v753 = vunpack.c.h.b16 %v656
    %v754 = vunpack.c.l.b16 %v657
    %v755 = vunpack.c.h.b16 %v657
    %v756 = vunpack.c.l.b16 %v658
    %v757 = vunpack.c.h.b16 %v658
    %v758 = vunpack.c.l.b16 %v659
    %v759 = vunpack.c.h.b16 %v659
    %v760 = vunpack.c.l.b16 %v660
    %v761 = vunpack.c.h.b16 %v660
    %v762 = vunpack.c.l.b16 %v661
    %v763 = vunpack.c.h.b16 %v661
    %v764 = vunpack.c.l.b16 %v662
    %v765 = vunpack.c.h.b16 %v662
    %v766 = vunpack.c.l.b16 %v663
    %v767 = vunpack.c.h.b16 %v663
    %v768 = vunpack.c.l.b16 %v664
    %v769 = vunpack.c.h.b16 %v664
    %v770 = vunpack.c.l.b16 %v665
    %v771 = vunpack.c.h.b16 %v665
    %v772 = vunpack.c.l.b16 %v666
    %v773 = vunpack.c.h.b16 %v666
    %v774 = vunpack.c.l.b16 %v667
    %v775 = vunpack.c.h.b16 %v667
    %v776 = vpack.c.b16 %v714, %v712
    %v777 = vpack.c.b16 %v715, %v713
    %v778 = vpack.c.b16 %v718, %v716
    %v779 = vpack.c.b16 %v719, %v717
    %v780 = vpack.c.b16 %v722, %v720
    %v781 = vpack.c.b16 %v723, %v721
    %v782 = vpack.c.b16 %v726, %v724
    %v783 = vpack.c.b16 %v727, %v725
    %v784 = vpack.c.b16 %v730, %v728
    %v785 = vpack.c.b16 %v731, %v729
    %v786 = vpack.c.b16 %v734, %v732
    %v787 = vpack.c.b16 %v735, %v733
    %v788 = vpack.c.b16 %v738, %v736
    %v789 = vpack.c.b16 %v739, %v737
    %v790 = vpack.c.b16 %v742, %v740
    %v791 = vpack.c.b16 %v743, %v741
    %v792 = vpack.c.b16 %v746, %v744
    %v793 = vpack.c.b16 %v747, %v745
    %v794 = vpack.c.b16 %v750, %v748
    %v795 = vpack.c.b16 %v751, %v749
    %v796 = vpack.c.b16 %v754, %v752
    %v797 = vpack.c.b16 %v755, %v753
    %v798 = vpack.c.b16 %v758, %v756
    %v799 = vpack.c.b16 %v759, %v757
    %v800 = vpack.c.b16 %v762, %v760
    %v801 = vpack.c.b16 %v763, %v761
    %v802 = vpack.c.b16 %v766, %v764
    %v803 = vpack.c.b16 %v767, %v765
    %v804 = vpack.c.b16 %v770, %v768
    %v805 = vpack.c.b16 %v771, %v769
    %v806 = vpack.c.b16 %v774, %v772
    %v807 = vpack.c.b16 %v775, %v773
    %840 = vmatprep.subr.bf16.mxu0 %v791
    %841 = vmatpush1.bf16.msra.mxu0 %v790
    %842 = vmatprep.subr.bf16.mxu0 %v789
    %843 = vmatpush1.bf16.msra.mxu0 %v788
    %844 = vmatprep.subr.bf16.mxu0 %v787
    %845 = vmatpush1.bf16.msra.mxu0 %v786
    %846 = vmatprep.subr.bf16.mxu0 %v785
    %847 = vmatpush1.bf16.msra.mxu0 %v784
    %848 = vmatprep.subr.bf16.mxu0 %v783
    %849 = vmatpush1.bf16.msra.mxu0 %v782
    %850 = vmatprep.subr.bf16.mxu0 %v781
    %851 = vmatpush1.bf16.msra.mxu0 %v780
    %852 = vmatprep.subr.bf16.mxu0 %v779
    %853 = vmatpush1.bf16.msra.mxu0 %v778
    %854 = vmatprep.subr.bf16.mxu0 %v777
    %855 = vmatpush1.bf16.msra.mxu0 %v776
    %856 = vmatprep.subr.bf16.mxu0 %v807
    %857 = vmatpush2.bf16.msra.mxu0 %v806
    %858 = vmatprep.subr.bf16.mxu0 %v805
    %859 = vmatpush2.bf16.msra.mxu0 %v804
    %860 = vmatprep.subr.bf16.mxu0 %v803
    %861 = vmatpush2.bf16.msra.mxu0 %v802
    %862 = vmatprep.subr.bf16.mxu0 %v801
    %863 = vmatpush2.bf16.msra.mxu0 %v800
    %864 = vmatprep.subr.bf16.mxu0 %v799
    %865 = vmatpush2.bf16.msra.mxu0 %v798
    %866 = vmatprep.subr.bf16.mxu0 %v797
    %867 = vmatpush2.bf16.msra.mxu0 %v796
    %868 = vmatprep.subr.bf16.mxu0 %v795
    %869 = vmatpush2.bf16.msra.mxu0 %v794
    %870 = vmatprep.subr.bf16.mxu0 %v793
    %871 = vmatpush2.bf16.msra.mxu0 %v792
    %872 = vmatprep.mubr.bf16.mxu0 %v635
    %873 = vmatmul.mubr.bf16.gmra.mxu0 %v634
    %v874 = vpop.f32.mrf.mxu0
    %v875 = vadd.f32 %v673, %v874
    %v876 = vpop.f32.mrf.mxu0
    %v877 = vadd.f32 %v677, %v876
    %v878 = vpop.f32.mrf.mxu0
    %v879 = vpop.f32.mrf.mxu0
    %880 = vdwg.mxu0
    %v881 = vpack.c.bf16 %v875, %v875
    %v882 = vpack.c.bf16 %v877, %v877
    %v883 = vld [vmem:[#allocation9] sm:$0xf]
    %v884 = vld [vmem:[#allocation9 + $0x4] sm:$0xf]
    %v885 = vld [vmem:[#allocation9 + $0x8] sm:$0xf]
    %v886 = vld [vmem:[#allocation9 + $0xc] sm:$0xf]
    %v887 = vld [vmem:[#allocation9 + $0x10] sm:$0xf]
    %v888 = vld [vmem:[#allocation9 + $0x14] sm:$0xf]
    %v889 = vld [vmem:[#allocation9 + $0x18] sm:$0xf]
    %v890 = vld [vmem:[#allocation9 + $0x1c] sm:$0xf]
    %v891 = vld [vmem:[#allocation9 + $0x20] sm:$0xf]
    %v892 = vld [vmem:[#allocation9 + $0x24] sm:$0xf]
    %v893 = vld [vmem:[#allocation9 + $0x28] sm:$0xf]
    %v894 = vld [vmem:[#allocation9 + $0x2c] sm:$0xf]
    %v895 = vld [vmem:[#allocation9 + $0x30] sm:$0xf]
    %v896 = vld [vmem:[#allocation9 + $0x34] sm:$0xf]
    %v897 = vld [vmem:[#allocation9 + $0x38] sm:$0xf]
    %v898 = vld [vmem:[#allocation9 + $0x3c] sm:$0xf]
    %v899 = vld [vmem:[#allocation9 + $0x40] sm:$0xf]
    %v900 = vld [vmem:[#allocation9 + $0x44] sm:$0xf]
    %v901 = vld [vmem:[#allocation9 + $0x48] sm:$0xf]
    %v902 = vld [vmem:[#allocation9 + $0x4c] sm:$0xf]
    %v903 = vld [vmem:[#allocation9 + $0x50] sm:$0xf]
    %v904 = vld [vmem:[#allocation9 + $0x54] sm:$0xf]
    %v905 = vld [vmem:[#allocation9 + $0x58] sm:$0xf]
    %v906 = vld [vmem:[#allocation9 + $0x5c] sm:$0xf]
    %v907 = vld [vmem:[#allocation9 + $0x60] sm:$0xf]
    %v908 = vld [vmem:[#allocation9 + $0x64] sm:$0xf]
    %v909 = vld [vmem:[#allocation9 + $0x68] sm:$0xf]
    %v910 = vld [vmem:[#allocation9 + $0x6c] sm:$0xf]
    %v911 = vld [vmem:[#allocation9 + $0x70] sm:$0xf]
    %v912 = vld [vmem:[#allocation9 + $0x74] sm:$0xf]
    %v913 = vld [vmem:[#allocation9 + $0x78] sm:$0xf]
    %v914 = vld [vmem:[#allocation9 + $0x7c] sm:$0xf]
    %v915 = vld [vmem:[%s23] sm:$0x1]
    %v917 = vlaneseq
    %v918 = vshrl.u32 %v917, 7
    %v919 = vsub.s32 0, %v918
    %v920 = vrot.slane %v915, %v919
    %v954 = vunpack.c.l.b16 %v883
    %v955 = vunpack.c.l.b16 %v884
    %v956 = vunpack.c.l.b16 %v885
    %v957 = vunpack.c.l.b16 %v886
    %v958 = vunpack.c.l.b16 %v887
    %v959 = vunpack.c.l.b16 %v888
    %v960 = vunpack.c.l.b16 %v889
    %v961 = vunpack.c.l.b16 %v890
    %v962 = vunpack.c.l.b16 %v891
    %v963 = vunpack.c.l.b16 %v892
    %v964 = vunpack.c.l.b16 %v893
    %v965 = vunpack.c.l.b16 %v894
    %v966 = vunpack.c.l.b16 %v895
    %v967 = vunpack.c.l.b16 %v896
    %v968 = vunpack.c.l.b16 %v897
    %v969 = vunpack.c.l.b16 %v898
    %v970 = vunpack.c.l.b16 %v899
    %v971 = vunpack.c.l.b16 %v900
    %v972 = vunpack.c.l.b16 %v901
    %v973 = vunpack.c.l.b16 %v902
    %v974 = vunpack.c.l.b16 %v903
    %v975 = vunpack.c.l.b16 %v904
    %v976 = vunpack.c.l.b16 %v905
    %v977 = vunpack.c.l.b16 %v906
    %v978 = vunpack.c.l.b16 %v907
    %v979 = vunpack.c.l.b16 %v908
    %v980 = vunpack.c.l.b16 %v909
    %v981 = vunpack.c.l.b16 %v910
    %v982 = vunpack.c.l.b16 %v911
    %v983 = vunpack.c.l.b16 %v912
    %v984 = vunpack.c.l.b16 %v913
    %v985 = vunpack.c.l.b16 %v914
    %v986 = vpack.c.b16 %v955, %v954
    %v987 = vpack.c.b16 %v957, %v956
    %v988 = vpack.c.b16 %v959, %v958
    %v989 = vpack.c.b16 %v961, %v960
    %v990 = vpack.c.b16 %v963, %v962
    %v991 = vpack.c.b16 %v965, %v964
    %v992 = vpack.c.b16 %v967, %v966
    %v993 = vpack.c.b16 %v969, %v968
    %v994 = vpack.c.b16 %v971, %v970
    %v995 = vpack.c.b16 %v973, %v972
    %v996 = vpack.c.b16 %v975, %v974
    %v997 = vpack.c.b16 %v977, %v976
    %v998 = vpack.c.b16 %v979, %v978
    %v999 = vpack.c.b16 %v981, %v980
    %v1000 = vpack.c.b16 %v983, %v982
    %v1001 = vpack.c.b16 %v985, %v984
    %1018 = vmatprep.subr.bf16.mxu0 0
    %1019 = vmatpush1.bf16.msra.mxu0 %v993
    %1020 = vmatprep.subr.bf16.mxu0 0
    %1021 = vmatpush1.bf16.msra.mxu0 %v992
    %1022 = vmatprep.subr.bf16.mxu0 0
    %1023 = vmatpush1.bf16.msra.mxu0 %v991
    %1024 = vmatprep.subr.bf16.mxu0 0
    %1025 = vmatpush1.bf16.msra.mxu0 %v990
    %1026 = vmatprep.subr.bf16.mxu0 0
    %1027 = vmatpush1.bf16.msra.mxu0 %v989
    %1028 = vmatprep.subr.bf16.mxu0 0
    %1029 = vmatpush1.bf16.msra.mxu0 %v988
    %1030 = vmatprep.subr.bf16.mxu0 0
    %1031 = vmatpush1.bf16.msra.mxu0 %v987
    %1032 = vmatprep.subr.bf16.mxu0 0
    %1033 = vmatpush1.bf16.msra.mxu0 %v986
    %1034 = vmatprep.subr.bf16.mxu0 0
    %1035 = vmatpush2.bf16.msra.mxu0 %v1001
    %1036 = vmatprep.subr.bf16.mxu0 0
    %1037 = vmatpush2.bf16.msra.mxu0 %v1000
    %1038 = vmatprep.subr.bf16.mxu0 0
    %1039 = vmatpush2.bf16.msra.mxu0 %v999
    %1040 = vmatprep.subr.bf16.mxu0 0
    %1041 = vmatpush2.bf16.msra.mxu0 %v998
    %1042 = vmatprep.subr.bf16.mxu0 0
    %1043 = vmatpush2.bf16.msra.mxu0 %v997
    %1044 = vmatprep.subr.bf16.mxu0 0
    %1045 = vmatpush2.bf16.msra.mxu0 %v996
    %1046 = vmatprep.subr.bf16.mxu0 0
    %1047 = vmatpush2.bf16.msra.mxu0 %v995
    %1048 = vmatprep.subr.bf16.mxu0 0
    %1049 = vmatpush2.bf16.msra.mxu0 %v994
    %1050 = vmatprep.mubr.bf16.mxu0 %v882
    %1051 = vmatmul.mubr.bf16.gmra.mxu0 %v881
    %v1052 = vpop.f32.mrf.mxu0
    %v1053 = vadd.f32 %v920, %v1052
    %v1054 = vpop.f32.mrf.mxu0
    %v1055 = vpop.f32.mrf.mxu0
    %v1056 = vpop.f32.mrf.mxu0
    %1057 = vdwg.mxu0
    %v1058 = vmul.f32 %v1053, 0.5
    %v1059 = vmul.f32 %v1053, 0.70710677
    %v1060 = verf.f32.pop %v1059
    %v1061 = vadd.f32 %v1060, 1.0
    %v1062 = vmul.f32 %v1058, %v1061
    %v1063 = vld [vmem:[%s25] sm:$0x1]
    %v1064 = vld [vmem:[%s27] sm:$0x1]
    %1065 = vadd.xlane.f32.xlu0 %v1062
    %v1066 = vpop.xlane.xlu0 %1065
    %v1067 = vrcp.pop 128.0
    %v1068 = vmul.f32 %v1066, %v1067
    %v1069 = vsub.f32 %v1062, %v1068
    %v1070 = vmul.f32 %v1069, %v1069
    %1071 = vadd.xlane.f32.xlu0 %v1070
    %v1072 = vpop.xlane.xlu0 %1071
    %v1073 = vmul.f32 %v1072, %v1067
    %v1074 = vadd.f32 %v1073, 1e-05
    %v1075 = vrsqrt.pop %v1074
    %v1076 = vmul.f32 %v1069, %v1075
    %v1078 = vlaneseq
    %v1079 = vshrl.u32 %v1078, 7
    %v1080 = vsub.s32 0, %v1079
    %v1081 = vrot.slane %v1063, %v1080
    %v1083 = vmul.f32 %v1076, %v1081
    %v1085 = vlaneseq
    %v1086 = vshrl.u32 %v1085, 7
    %v1087 = vsub.s32 0, %v1086
    %v1088 = vrot.slane %v1064, %v1087
    %v1090 = vadd.f32 %v1083, %v1088
    %v1091 = vpack.c.bf16 %v1090, %v1090
    %v1092 = vld [vmem:[#allocation10] sm:$0xff]
    %v1093 = vld [vmem:[#allocation10 + $0x8] sm:$0xff]
    %v1094 = vld [vmem:[#allocation10 + $0x10] sm:$0xff]
    %v1095 = vld [vmem:[#allocation10 + $0x18] sm:$0xff]
    %v1096 = vld [vmem:[#allocation10 + $0x20] sm:$0xff]
    %v1097 = vld [vmem:[#allocation10 + $0x28] sm:$0xff]
    %v1098 = vld [vmem:[#allocation10 + $0x30] sm:$0xff]
    %v1099 = vld [vmem:[#allocation10 + $0x38] sm:$0xff]
    %v1100 = vld [vmem:[#allocation10 + $0x40] sm:$0xff]
    %v1101 = vld [vmem:[#allocation10 + $0x48] sm:$0xff]
    %v1102 = vld [vmem:[#allocation10 + $0x50] sm:$0xff]
    %v1103 = vld [vmem:[#allocation10 + $0x58] sm:$0xff]
    %v1104 = vld [vmem:[#allocation10 + $0x60] sm:$0xff]
    %v1105 = vld [vmem:[#allocation10 + $0x68] sm:$0xff]
    %v1106 = vld [vmem:[#allocation10 + $0x70] sm:$0xff]
    %v1107 = vld [vmem:[#allocation10 + $0x78] sm:$0xff]
    %v1108 = vld [vmem:[%s31] sm:$0x3]
    %v1110 = vlaneseq
    %v1111 = vshrl.u32 %v1110, 7
    %v1112 = vsub.s32 0, %v1111
    %v1113 = vrot.slane %v1108, %v1112
    %v1114 = vlaneseq
    %v1115 = vshrl.u32 %v1114, 7
    %v1116 = vsub.s32 1, %v1115
    %v1117 = vrot.slane %v1108, %v1116
    %v1136 = vunpack.c.l.b16 %v1092
    %v1137 = vunpack.c.h.b16 %v1092
    %v1138 = vunpack.c.l.b16 %v1093
    %v1139 = vunpack.c.h.b16 %v1093
    %v1140 = vunpack.c.l.b16 %v1094
    %v1141 = vunpack.c.h.b16 %v1094
    %v1142 = vunpack.c.l.b16 %v1095
    %v1143 = vunpack.c.h.b16 %v1095
    %v1144 = vunpack.c.l.b16 %v1096
    %v1145 = vunpack.c.h.b16 %v1096
    %v1146 = vunpack.c.l.b16 %v1097
    %v1147 = vunpack.c.h.b16 %v1097
    %v1148 = vunpack.c.l.b16 %v1098
    %v1149 = vunpack.c.h.b16 %v1098
    %v1150 = vunpack.c.l.b16 %v1099
    %v1151 = vunpack.c.h.b16 %v1099
    %v1152 = vunpack.c.l.b16 %v1100
    %v1153 = vunpack.c.h.b16 %v1100
    %v1154 = vunpack.c.l.b16 %v1101
    %v1155 = vunpack.c.h.b16 %v1101
    %v1156 = vunpack.c.l.b16 %v1102
    %v1157 = vunpack.c.h.b16 %v1102
    %v1158 = vunpack.c.l.b16 %v1103
    %v1159 = vunpack.c.h.b16 %v1103
    %v1160 = vunpack.c.l.b16 %v1104
    %v1161 = vunpack.c.h.b16 %v1104
    %v1162 = vunpack.c.l.b16 %v1105
    %v1163 = vunpack.c.h.b16 %v1105
    %v1164 = vunpack.c.l.b16 %v1106
    %v1165 = vunpack.c.h.b16 %v1106
    %v1166 = vunpack.c.l.b16 %v1107
    %v1167 = vunpack.c.h.b16 %v1107
    %v1168 = vpack.c.b16 %v1138, %v1136
    %v1169 = vpack.c.b16 %v1139, %v1137
    %v1170 = vpack.c.b16 %v1142, %v1140
    %v1171 = vpack.c.b16 %v1143, %v1141
    %v1172 = vpack.c.b16 %v1146, %v1144
    %v1173 = vpack.c.b16 %v1147, %v1145
    %v1174 = vpack.c.b16 %v1150, %v1148
    %v1175 = vpack.c.b16 %v1151, %v1149
    %v1176 = vpack.c.b16 %v1154, %v1152
    %v1177 = vpack.c.b16 %v1155, %v1153
    %v1178 = vpack.c.b16 %v1158, %v1156
    %v1179 = vpack.c.b16 %v1159, %v1157
    %v1180 = vpack.c.b16 %v1162, %v1160
    %v1181 = vpack.c.b16 %v1163, %v1161
    %v1182 = vpack.c.b16 %v1166, %v1164
    %v1183 = vpack.c.b16 %v1167, %v1165
    %1200 = vmatprep.subr.bf16.mxu0 %v1183
    %1201 = vmatpush1.bf16.msra.mxu0 %v1182
    %1202 = vmatprep.subr.bf16.mxu0 %v1181
    %1203 = vmatpush1.bf16.msra.mxu0 %v1180
    %1204 = vmatprep.subr.bf16.mxu0 %v1179
    %1205 = vmatpush1.bf16.msra.mxu0 %v1178
    %1206 = vmatprep.subr.bf16.mxu0 %v1177
    %1207 = vmatpush1.bf16.msra.mxu0 %v1176
    %1208 = vmatprep.subr.bf16.mxu0 %v1175
    %1209 = vmatpush1.bf16.msra.mxu0 %v1174
    %1210 = vmatprep.subr.bf16.mxu0 %v1173
    %1211 = vmatpush1.bf16.msra.mxu0 %v1172
    %1212 = vmatprep.subr.bf16.mxu0 %v1171
    %1213 = vmatpush1.bf16.msra.mxu0 %v1170
    %1214 = vmatprep.subr.bf16.mxu0 %v1169
    %1215 = vmatpush1.bf16.msra.mxu0 %v1168
    %1216 = vmatprep.subr.bf16.mxu0 0
    %1217 = vmatpush2.bf16.msra.mxu0 0
    %1218 = vmatprep.subr.bf16.mxu0 0
    %1219 = vmatpush2.bf16.msra.mxu0 0
    %1220 = vmatprep.subr.bf16.mxu0 0
    %1221 = vmatpush2.bf16.msra.mxu0 0
    %1222 = vmatprep.subr.bf16.mxu0 0
    %1223 = vmatpush2.bf16.msra.mxu0 0
    %1224 = vmatprep.subr.bf16.mxu0 0
    %1225 = vmatpush2.bf16.msra.mxu0 0
    %1226 = vmatprep.subr.bf16.mxu0 0
    %1227 = vmatpush2.bf16.msra.mxu0 0
    %1228 = vmatprep.subr.bf16.mxu0 0
    %1229 = vmatpush2.bf16.msra.mxu0 0
    %1230 = vmatprep.subr.bf16.mxu0 0
    %1231 = vmatpush2.bf16.msra.mxu0 0
    %1232 = vmatprep.mubr.bf16.mxu0 0
    %1233 = vmatmul.mubr.bf16.gmra.mxu0 %v1091
    %v1234 = vpop.f32.mrf.mxu0
    %v1235 = vadd.f32 %v1113, %v1234
    %v1236 = vpop.f32.mrf.mxu0
    %v1237 = vadd.f32 %v1117, %v1236
    %v1238 = vpop.f32.mrf.mxu0
    %v1239 = vpop.f32.mrf.mxu0
    %1240 = vdwg.mxu0
    %v1241 = vmul.f32 %v1235, 0.5
    %v1242 = vmul.f32 %v1237, 0.5
    %v1243 = vmul.f32 %v1235, 0.70710677
    %v1244 = vmul.f32 %v1237, 0.70710677
    %v1245 = verf.f32.pop %v1243
    %v1246 = verf.f32.pop %v1244
    %v1247 = vadd.f32 %v1245, 1.0
    %v1248 = vadd.f32 %v1246, 1.0
    %v1249 = vmul.f32 %v1241, %v1247
    %v1250 = vmul.f32 %v1242, %v1248
    %v1251 = vadd.f32 %v875, %v1249
    %v1252 = vadd.f32 %v877, %v1250
    %v1253 = vadd.f32 %v285, %v1251
    %v1254 = vadd.f32 %v286, %v1252
    %v1255 = vld [vmem:[%s33] sm:$0x3]
    %v1256 = vld [vmem:[%s35] sm:$0x3]
    %v1257 = vadd.f32 %v285, %v286
    %1258 = vadd.xlane.f32.xlu0 %v1257
    %v1259 = vpop.xlane.xlu0 %1258
    %v1260 = vmul.f32 %v1259, %v594
    %v1261 = vsub.f32 %v285, %v1260
    %v1262 = vsub.f32 %v286, %v1260
    %v1263 = vmul.f32 %v1261, %v1261
    %v1264 = vmul.f32 %v1262, %v1262
    %v1265 = vadd.f32 %v1263, %v1264
    %1266 = vadd.xlane.f32.xlu0 %v1265
    %v1267 = vpop.xlane.xlu0 %1266
    %v1268 = vmul.f32 %v1267, %v594
    %v1269 = vadd.f32 %v1268, 1e-05
    %v1270 = vrsqrt.pop %v1269
    %v1271 = vmul.f32 %v1261, %v1270
    %v1272 = vmul.f32 %v1262, %v1270
    %v1274 = vlaneseq
    %v1275 = vshrl.u32 %v1274, 7
    %v1276 = vsub.s32 0, %v1275
    %v1277 = vrot.slane %v1255, %v1276
    %v1278 = vlaneseq
    %v1279 = vshrl.u32 %v1278, 7
    %v1280 = vsub.s32 1, %v1279
    %v1281 = vrot.slane %v1255, %v1280
    %v1284 = vmul.f32 %v1271, %v1277
    %v1285 = vmul.f32 %v1272, %v1281
    %v1287 = vlaneseq
    %v1288 = vshrl.u32 %v1287, 7
    %v1289 = vsub.s32 0, %v1288
    %v1290 = vrot.slane %v1256, %v1289
    %v1291 = vlaneseq
    %v1292 = vshrl.u32 %v1291, 7
    %v1293 = vsub.s32 1, %v1292
    %v1294 = vrot.slane %v1256, %v1293
    %v1297 = vadd.f32 %v1284, %v1290
    %v1298 = vadd.f32 %v1285, %v1294
    %v1299 = vpack.c.bf16 %v1297, %v1297
    %v1300 = vpack.c.bf16 %v1298, %v1298
    %v1301 = vld [vmem:[#allocation12] sm:$0xff]
    %v1302 = vld [vmem:[#allocation12 + $0x8] sm:$0xff]
    %v1303 = vld [vmem:[#allocation12 + $0x10] sm:$0xff]
    %v1304 = vld [vmem:[#allocation12 + $0x18] sm:$0xff]
    %v1305 = vld [vmem:[#allocation12 + $0x20] sm:$0xff]
    %v1306 = vld [vmem:[#allocation12 + $0x28] sm:$0xff]
    %v1307 = vld [vmem:[#allocation12 + $0x30] sm:$0xff]
    %v1308 = vld [vmem:[#allocation12 + $0x38] sm:$0xff]
    %v1309 = vld [vmem:[#allocation12 + $0x40] sm:$0xff]
    %v1310 = vld [vmem:[#allocation12 + $0x48] sm:$0xff]
    %v1311 = vld [vmem:[#allocation12 + $0x50] sm:$0xff]
    %v1312 = vld [vmem:[#allocation12 + $0x58] sm:$0xff]
    %v1313 = vld [vmem:[#allocation12 + $0x60] sm:$0xff]
    %v1314 = vld [vmem:[#allocation12 + $0x68] sm:$0xff]
    %v1315 = vld [vmem:[#allocation12 + $0x70] sm:$0xff]
    %v1316 = vld [vmem:[#allocation12 + $0x78] sm:$0xff]
    %v1317 = vld [vmem:[#allocation12 + $0x80] sm:$0xff]
    %v1318 = vld [vmem:[#allocation12 + $0x88] sm:$0xff]
    %v1319 = vld [vmem:[#allocation12 + $0x90] sm:$0xff]
    %v1320 = vld [vmem:[#allocation12 + $0x98] sm:$0xff]
    %v1321 = vld [vmem:[#allocation12 + $0xa0] sm:$0xff]
    %v1322 = vld [vmem:[#allocation12 + $0xa8] sm:$0xff]
    %v1323 = vld [vmem:[#allocation12 + $0xb0] sm:$0xff]
    %v1324 = vld [vmem:[#allocation12 + $0xb8] sm:$0xff]
    %v1325 = vld [vmem:[#allocation12 + $0xc0] sm:$0xff]
    %v1326 = vld [vmem:[#allocation12 + $0xc8] sm:$0xff]
    %v1327 = vld [vmem:[#allocation12 + $0xd0] sm:$0xff]
    %v1328 = vld [vmem:[#allocation12 + $0xd8] sm:$0xff]
    %v1329 = vld [vmem:[#allocation12 + $0xe0] sm:$0xff]
    %v1330 = vld [vmem:[#allocation12 + $0xe8] sm:$0xff]
    %v1331 = vld [vmem:[#allocation12 + $0xf0] sm:$0xff]
    %v1332 = vld [vmem:[#allocation12 + $0xf8] sm:$0xff]
    %v1333 = vld [vmem:[%s39] sm:$0x3]
    %v1335 = vlaneseq
    %v1336 = vshrl.u32 %v1335, 7
    %v1337 = vsub.s32 0, %v1336
    %v1338 = vrot.slane %v1333, %v1337
    %v1339 = vlaneseq
    %v1340 = vshrl.u32 %v1339, 7
    %v1341 = vsub.s32 1, %v1340
    %v1342 = vrot.slane %v1333, %v1341
    %v1377 = vunpack.c.l.b16 %v1301
    %v1378 = vunpack.c.h.b16 %v1301
    %v1379 = vunpack.c.l.b16 %v1302
    %v1380 = vunpack.c.h.b16 %v1302
    %v1381 = vunpack.c.l.b16 %v1303
    %v1382 = vunpack.c.h.b16 %v1303
    %v1383 = vunpack.c.l.b16 %v1304
    %v1384 = vunpack.c.h.b16 %v1304
    %v1385 = vunpack.c.l.b16 %v1305
    %v1386 = vunpack.c.h.b16 %v1305
    %v1387 = vunpack.c.l.b16 %v1306
    %v1388 = vunpack.c.h.b16 %v1306
    %v1389 = vunpack.c.l.b16 %v1307
    %v1390 = vunpack.c.h.b16 %v1307
    %v1391 = vunpack.c.l.b16 %v1308
    %v1392 = vunpack.c.h.b16 %v1308
    %v1393 = vunpack.c.l.b16 %v1309
    %v1394 = vunpack.c.h.b16 %v1309
    %v1395 = vunpack.c.l.b16 %v1310
    %v1396 = vunpack.c.h.b16 %v1310
    %v1397 = vunpack.c.l.b16 %v1311
    %v1398 = vunpack.c.h.b16 %v1311
    %v1399 = vunpack.c.l.b16 %v1312
    %v1400 = vunpack.c.h.b16 %v1312
    %v1401 = vunpack.c.l.b16 %v1313
    %v1402 = vunpack.c.h.b16 %v1313
    %v1403 = vunpack.c.l.b16 %v1314
    %v1404 = vunpack.c.h.b16 %v1314
    %v1405 = vunpack.c.l.b16 %v1315
    %v1406 = vunpack.c.h.b16 %v1315
    %v1407 = vunpack.c.l.b16 %v1316
    %v1408 = vunpack.c.h.b16 %v1316
    %v1409 = vunpack.c.l.b16 %v1317
    %v1410 = vunpack.c.h.b16 %v1317
    %v1411 = vunpack.c.l.b16 %v1318
    %v1412 = vunpack.c.h.b16 %v1318
    %v1413 = vunpack.c.l.b16 %v1319
    %v1414 = vunpack.c.h.b16 %v1319
    %v1415 = vunpack.c.l.b16 %v1320
    %v1416 = vunpack.c.h.b16 %v1320
    %v1417 = vunpack.c.l.b16 %v1321
    %v1418 = vunpack.c.h.b16 %v1321
    %v1419 = vunpack.c.l.b16 %v1322
    %v1420 = vunpack.c.h.b16 %v1322
    %v1421 = vunpack.c.l.b16 %v1323
    %v1422 = vunpack.c.h.b16 %v1323
    %v1423 = vunpack.c.l.b16 %v1324
    %v1424 = vunpack.c.h.b16 %v1324
    %v1425 = vunpack.c.l.b16 %v1325
    %v1426 = vunpack.c.h.b16 %v1325
    %v1427 = vunpack.c.l.b16 %v1326
    %v1428 = vunpack.c.h.b16 %v1326
    %v1429 = vunpack.c.l.b16 %v1327
    %v1430 = vunpack.c.h.b16 %v1327
    %v1431 = vunpack.c.l.b16 %v1328
    %v1432 = vunpack.c.h.b16 %v1328
    %v1433 = vunpack.c.l.b16 %v1329
    %v1434 = vunpack.c.h.b16 %v1329
    %v1435 = vunpack.c.l.b16 %v1330
    %v1436 = vunpack.c.h.b16 %v1330
    %v1437 = vunpack.c.l.b16 %v1331
    %v1438 = vunpack.c.h.b16 %v1331
    %v1439 = vunpack.c.l.b16 %v1332
    %v1440 = vunpack.c.h.b16 %v1332
    %v1441 = vpack.c.b16 %v1379, %v1377
    %v1442 = vpack.c.b16 %v1380, %v1378
    %v1443 = vpack.c.b16 %v1383, %v1381
    %v1444 = vpack.c.b16 %v1384, %v1382
    %v1445 = vpack.c.b16 %v1387, %v1385
    %v1446 = vpack.c.b16 %v1388, %v1386
    %v1447 = vpack.c.b16 %v1391, %v1389
    %v1448 = vpack.c.b16 %v1392, %v1390
    %v1449 = vpack.c.b16 %v1395, %v1393
    %v1450 = vpack.c.b16 %v1396, %v1394
    %v1451 = vpack.c.b16 %v1399, %v1397
    %v1452 = vpack.c.b16 %v1400, %v1398
    %v1453 = vpack.c.b16 %v1403, %v1401
    %v1454 = vpack.c.b16 %v1404, %v1402
    %v1455 = vpack.c.b16 %v1407, %v1405
    %v1456 = vpack.c.b16 %v1408, %v1406
    %v1457 = vpack.c.b16 %v1411, %v1409
    %v1458 = vpack.c.b16 %v1412, %v1410
    %v1459 = vpack.c.b16 %v1415, %v1413
    %v1460 = vpack.c.b16 %v1416, %v1414
    %v1461 = vpack.c.b16 %v1419, %v1417
    %v1462 = vpack.c.b16 %v1420, %v1418
    %v1463 = vpack.c.b16 %v1423, %v1421
    %v1464 = vpack.c.b16 %v1424, %v1422
    %v1465 = vpack.c.b16 %v1427, %v1425
    %v1466 = vpack.c.b16 %v1428, %v1426
    %v1467 = vpack.c.b16 %v1431, %v1429
    %v1468 = vpack.c.b16 %v1432, %v1430
    %v1469 = vpack.c.b16 %v1435, %v1433
    %v1470 = vpack.c.b16 %v1436, %v1434
    %v1471 = vpack.c.b16 %v1439, %v1437
    %v1472 = vpack.c.b16 %v1440, %v1438
    %1505 = vmatprep.subr.bf16.mxu0 %v1456
    %1506 = vmatpush1.bf16.msra.mxu0 %v1455
    %1507 = vmatprep.subr.bf16.mxu0 %v1454
    %1508 = vmatpush1.bf16.msra.mxu0 %v1453
    %1509 = vmatprep.subr.bf16.mxu0 %v1452
    %1510 = vmatpush1.bf16.msra.mxu0 %v1451
    %1511 = vmatprep.subr.bf16.mxu0 %v1450
    %1512 = vmatpush1.bf16.msra.mxu0 %v1449
    %1513 = vmatprep.subr.bf16.mxu0 %v1448
    %1514 = vmatpush1.bf16.msra.mxu0 %v1447
    %1515 = vmatprep.subr.bf16.mxu0 %v1446
    %1516 = vmatpush1.bf16.msra.mxu0 %v1445
    %1517 = vmatprep.subr.bf16.mxu0 %v1444
    %1518 = vmatpush1.bf16.msra.mxu0 %v1443
    %1519 = vmatprep.subr.bf16.mxu0 %v1442
    %1520 = vmatpush1.bf16.msra.mxu0 %v1441
    %1521 = vmatprep.subr.bf16.mxu0 %v1472
    %1522 = vmatpush2.bf16.msra.mxu0 %v1471
    %1523 = vmatprep.subr.bf16.mxu0 %v1470
    %1524 = vmatpush2.bf16.msra.mxu0 %v1469
    %1525 = vmatprep.subr.bf16.mxu0 %v1468
    %1526 = vmatpush2.bf16.msra.mxu0 %v1467
    %1527 = vmatprep.subr.bf16.mxu0 %v1466
    %1528 = vmatpush2.bf16.msra.mxu0 %v1465
    %1529 = vmatprep.subr.bf16.mxu0 %v1464
    %1530 = vmatpush2.bf16.msra.mxu0 %v1463
    %1531 = vmatprep.subr.bf16.mxu0 %v1462
    %1532 = vmatpush2.bf16.msra.mxu0 %v1461
    %1533 = vmatprep.subr.bf16.mxu0 %v1460
    %1534 = vmatpush2.bf16.msra.mxu0 %v1459
    %1535 = vmatprep.subr.bf16.mxu0 %v1458
    %1536 = vmatpush2.bf16.msra.mxu0 %v1457
    %1537 = vmatprep.mubr.bf16.mxu0 %v1300
    %1538 = vmatmul.mubr.bf16.gmra.mxu0 %v1299
    %v1539 = vpop.f32.mrf.mxu0
    %v1540 = vadd.f32 %v1338, %v1539
    %v1541 = vpop.f32.mrf.mxu0
    %v1542 = vadd.f32 %v1342, %v1541
    %v1543 = vpop.f32.mrf.mxu0
    %v1544 = vpop.f32.mrf.mxu0
    %1545 = vdwg.mxu0
    %v1546 = vpack.c.bf16 %v1540, %v1540
    %v1547 = vpack.c.bf16 %v1542, %v1542
    %v1548 = vld [vmem:[#allocation13] sm:$0xf]
    %v1549 = vld [vmem:[#allocation13 + $0x4] sm:$0xf]
    %v1550 = vld [vmem:[#allocation13 + $0x8] sm:$0xf]
    %v1551 = vld [vmem:[#allocation13 + $0xc] sm:$0xf]
    %v1552 = vld [vmem:[#allocation13 + $0x10] sm:$0xf]
    %v1553 = vld [vmem:[#allocation13 + $0x14] sm:$0xf]
    %v1554 = vld [vmem:[#allocation13 + $0x18] sm:$0xf]
    %v1555 = vld [vmem:[#allocation13 + $0x1c] sm:$0xf]
    %v1556 = vld [vmem:[#allocation13 + $0x20] sm:$0xf]
    %v1557 = vld [vmem:[#allocation13 + $0x24] sm:$0xf]
    %v1558 = vld [vmem:[#allocation13 + $0x28] sm:$0xf]
    %v1559 = vld [vmem:[#allocation13 + $0x2c] sm:$0xf]
    %v1560 = vld [vmem:[#allocation13 + $0x30] sm:$0xf]
    %v1561 = vld [vmem:[#allocation13 + $0x34] sm:$0xf]
    %v1562 = vld [vmem:[#allocation13 + $0x38] sm:$0xf]
    %v1563 = vld [vmem:[#allocation13 + $0x3c] sm:$0xf]
    %v1564 = vld [vmem:[#allocation13 + $0x40] sm:$0xf]
    %v1565 = vld [vmem:[#allocation13 + $0x44] sm:$0xf]
    %v1566 = vld [vmem:[#allocation13 + $0x48] sm:$0xf]
    %v1567 = vld [vmem:[#allocation13 + $0x4c] sm:$0xf]
    %v1568 = vld [vmem:[#allocation13 + $0x50] sm:$0xf]
    %v1569 = vld [vmem:[#allocation13 + $0x54] sm:$0xf]
    %v1570 = vld [vmem:[#allocation13 + $0x58] sm:$0xf]
    %v1571 = vld [vmem:[#allocation13 + $0x5c] sm:$0xf]
    %v1572 = vld [vmem:[#allocation13 + $0x60] sm:$0xf]
    %v1573 = vld [vmem:[#allocation13 + $0x64] sm:$0xf]
    %v1574 = vld [vmem:[#allocation13 + $0x68] sm:$0xf]
    %v1575 = vld [vmem:[#allocation13 + $0x6c] sm:$0xf]
    %v1576 = vld [vmem:[#allocation13 + $0x70] sm:$0xf]
    %v1577 = vld [vmem:[#allocation13 + $0x74] sm:$0xf]
    %v1578 = vld [vmem:[#allocation13 + $0x78] sm:$0xf]
    %v1579 = vld [vmem:[#allocation13 + $0x7c] sm:$0xf]
    %v1580 = vld [vmem:[%s43] sm:$0x1]
    %v1582 = vlaneseq
    %v1583 = vshrl.u32 %v1582, 7
    %v1584 = vsub.s32 0, %v1583
    %v1585 = vrot.slane %v1580, %v1584
    %v1619 = vunpack.c.l.b16 %v1548
    %v1620 = vunpack.c.l.b16 %v1549
    %v1621 = vunpack.c.l.b16 %v1550
    %v1622 = vunpack.c.l.b16 %v1551
    %v1623 = vunpack.c.l.b16 %v1552
    %v1624 = vunpack.c.l.b16 %v1553
    %v1625 = vunpack.c.l.b16 %v1554
    %v1626 = vunpack.c.l.b16 %v1555
    %v1627 = vunpack.c.l.b16 %v1556
    %v1628 = vunpack.c.l.b16 %v1557
    %v1629 = vunpack.c.l.b16 %v1558
    %v1630 = vunpack.c.l.b16 %v1559
    %v1631 = vunpack.c.l.b16 %v1560
    %v1632 = vunpack.c.l.b16 %v1561
    %v1633 = vunpack.c.l.b16 %v1562
    %v1634 = vunpack.c.l.b16 %v1563
    %v1635 = vunpack.c.l.b16 %v1564
    %v1636 = vunpack.c.l.b16 %v1565
    %v1637 = vunpack.c.l.b16 %v1566
    %v1638 = vunpack.c.l.b16 %v1567
    %v1639 = vunpack.c.l.b16 %v1568
    %v1640 = vunpack.c.l.b16 %v1569
    %v1641 = vunpack.c.l.b16 %v1570
    %v1642 = vunpack.c.l.b16 %v1571
    %v1643 = vunpack.c.l.b16 %v1572
    %v1644 = vunpack.c.l.b16 %v1573
    %v1645 = vunpack.c.l.b16 %v1574
    %v1646 = vunpack.c.l.b16 %v1575
    %v1647 = vunpack.c.l.b16 %v1576
    %v1648 = vunpack.c.l.b16 %v1577
    %v1649 = vunpack.c.l.b16 %v1578
    %v1650 = vunpack.c.l.b16 %v1579
    %v1651 = vpack.c.b16 %v1620, %v1619
    %v1652 = vpack.c.b16 %v1622, %v1621
    %v1653 = vpack.c.b16 %v1624, %v1623
    %v1654 = vpack.c.b16 %v1626, %v1625
    %v1655 = vpack.c.b16 %v1628, %v1627
    %v1656 = vpack.c.b16 %v1630, %v1629
    %v1657 = vpack.c.b16 %v1632, %v1631
    %v1658 = vpack.c.b16 %v1634, %v1633
    %v1659 = vpack.c.b16 %v1636, %v1635
    %v1660 = vpack.c.b16 %v1638, %v1637
    %v1661 = vpack.c.b16 %v1640, %v1639
    %v1662 = vpack.c.b16 %v1642, %v1641
    %v1663 = vpack.c.b16 %v1644, %v1643
    %v1664 = vpack.c.b16 %v1646, %v1645
    %v1665 = vpack.c.b16 %v1648, %v1647
    %v1666 = vpack.c.b16 %v1650, %v1649
    %1683 = vmatprep.subr.bf16.mxu0 0
    %1684 = vmatpush1.bf16.msra.mxu0 %v1658
    %1685 = vmatprep.subr.bf16.mxu0 0
    %1686 = vmatpush1.bf16.msra.mxu0 %v1657
    %1687 = vmatprep.subr.bf16.mxu0 0
    %1688 = vmatpush1.bf16.msra.mxu0 %v1656
    %1689 = vmatprep.subr.bf16.mxu0 0
    %1690 = vmatpush1.bf16.msra.mxu0 %v1655
    %1691 = vmatprep.subr.bf16.mxu0 0
    %1692 = vmatpush1.bf16.msra.mxu0 %v1654
    %1693 = vmatprep.subr.bf16.mxu0 0
    %1694 = vmatpush1.bf16.msra.mxu0 %v1653
    %1695 = vmatprep.subr.bf16.mxu0 0
    %1696 = vmatpush1.bf16.msra.mxu0 %v1652
    %1697 = vmatprep.subr.bf16.mxu0 0
    %1698 = vmatpush1.bf16.msra.mxu0 %v1651
    %1699 = vmatprep.subr.bf16.mxu0 0
    %1700 = vmatpush2.bf16.msra.mxu0 %v1666
    %1701 = vmatprep.subr.bf16.mxu0 0
    %1702 = vmatpush2.bf16.msra.mxu0 %v1665
    %1703 = vmatprep.subr.bf16.mxu0 0
    %1704 = vmatpush2.bf16.msra.mxu0 %v1664
    %1705 = vmatprep.subr.bf16.mxu0 0
    %1706 = vmatpush2.bf16.msra.mxu0 %v1663
    %1707 = vmatprep.subr.bf16.mxu0 0
    %1708 = vmatpush2.bf16.msra.mxu0 %v1662
    %1709 = vmatprep.subr.bf16.mxu0 0
    %1710 = vmatpush2.bf16.msra.mxu0 %v1661
    %1711 = vmatprep.subr.bf16.mxu0 0
    %1712 = vmatpush2.bf16.msra.mxu0 %v1660
    %1713 = vmatprep.subr.bf16.mxu0 0
    %1714 = vmatpush2.bf16.msra.mxu0 %v1659
    %1715 = vmatprep.mubr.bf16.mxu0 %v1547
    %1716 = vmatmul.mubr.bf16.gmra.mxu0 %v1546
    %v1717 = vpop.f32.mrf.mxu0
    %v1718 = vadd.f32 %v1585, %v1717
    %v1719 = vpop.f32.mrf.mxu0
    %v1720 = vpop.f32.mrf.mxu0
    %v1721 = vpop.f32.mrf.mxu0
    %1722 = vdwg.mxu0
    %v1723 = vmul.f32 %v1718, 0.5
    %v1724 = vmul.f32 %v1718, 0.70710677
    %v1725 = verf.f32.pop %v1724
    %v1726 = vadd.f32 %v1725, 1.0
    %v1727 = vmul.f32 %v1723, %v1726
    %v1728 = vld [vmem:[%s45] sm:$0x1]
    %v1729 = vld [vmem:[%s47] sm:$0x1]
    %1730 = vadd.xlane.f32.xlu0 %v1727
    %v1731 = vpop.xlane.xlu0 %1730
    %v1732 = vmul.f32 %v1731, %v1067
    %v1733 = vsub.f32 %v1727, %v1732
    %v1734 = vmul.f32 %v1733, %v1733
    %1735 = vadd.xlane.f32.xlu0 %v1734
    %v1736 = vpop.xlane.xlu0 %1735
    %v1737 = vmul.f32 %v1736, %v1067
    %v1738 = vadd.f32 %v1737, 1e-05
    %v1739 = vrsqrt.pop %v1738
    %v1740 = vmul.f32 %v1733, %v1739
    %v1742 = vlaneseq
    %v1743 = vshrl.u32 %v1742, 7
    %v1744 = vsub.s32 0, %v1743
    %v1745 = vrot.slane %v1728, %v1744
    %v1747 = vmul.f32 %v1740, %v1745
    %v1749 = vlaneseq
    %v1750 = vshrl.u32 %v1749, 7
    %v1751 = vsub.s32 0, %v1750
    %v1752 = vrot.slane %v1729, %v1751
    %v1754 = vadd.f32 %v1747, %v1752
    %v1755 = vpack.c.bf16 %v1754, %v1754
    %v1756 = vld [vmem:[#allocation15] sm:$0xff]
    %v1757 = vld [vmem:[#allocation15 + $0x8] sm:$0xff]
    %v1758 = vld [vmem:[#allocation15 + $0x10] sm:$0xff]
    %v1759 = vld [vmem:[#allocation15 + $0x18] sm:$0xff]
    %v1760 = vld [vmem:[#allocation15 + $0x20] sm:$0xff]
    %v1761 = vld [vmem:[#allocation15 + $0x28] sm:$0xff]
    %v1762 = vld [vmem:[#allocation15 + $0x30] sm:$0xff]
    %v1763 = vld [vmem:[#allocation15 + $0x38] sm:$0xff]
    %v1764 = vld [vmem:[#allocation15 + $0x40] sm:$0xff]
    %v1765 = vld [vmem:[#allocation15 + $0x48] sm:$0xff]
    %v1766 = vld [vmem:[#allocation15 + $0x50] sm:$0xff]
    %v1767 = vld [vmem:[#allocation15 + $0x58] sm:$0xff]
    %v1768 = vld [vmem:[#allocation15 + $0x60] sm:$0xff]
    %v1769 = vld [vmem:[#allocation15 + $0x68] sm:$0xff]
    %v1770 = vld [vmem:[#allocation15 + $0x70] sm:$0xff]
    %v1771 = vld [vmem:[#allocation15 + $0x78] sm:$0xff]
    %v1772 = vld [vmem:[%s51] sm:$0x3]
    %v1774 = vlaneseq
    %v1775 = vshrl.u32 %v1774, 7
    %v1776 = vsub.s32 0, %v1775
    %v1777 = vrot.slane %v1772, %v1776
    %v1778 = vlaneseq
    %v1779 = vshrl.u32 %v1778, 7
    %v1780 = vsub.s32 1, %v1779
    %v1781 = vrot.slane %v1772, %v1780
    %v1800 = vunpack.c.l.b16 %v1756
    %v1801 = vunpack.c.h.b16 %v1756
    %v1802 = vunpack.c.l.b16 %v1757
    %v1803 = vunpack.c.h.b16 %v1757
    %v1804 = vunpack.c.l.b16 %v1758
    %v1805 = vunpack.c.h.b16 %v1758
    %v1806 = vunpack.c.l.b16 %v1759
    %v1807 = vunpack.c.h.b16 %v1759
    %v1808 = vunpack.c.l.b16 %v1760
    %v1809 = vunpack.c.h.b16 %v1760
    %v1810 = vunpack.c.l.b16 %v1761
    %v1811 = vunpack.c.h.b16 %v1761
    %v1812 = vunpack.c.l.b16 %v1762
    %v1813 = vunpack.c.h.b16 %v1762
    %v1814 = vunpack.c.l.b16 %v1763
    %v1815 = vunpack.c.h.b16 %v1763
    %v1816 = vunpack.c.l.b16 %v1764
    %v1817 = vunpack.c.h.b16 %v1764
    %v1818 = vunpack.c.l.b16 %v1765
    %v1819 = vunpack.c.h.b16 %v1765
    %v1820 = vunpack.c.l.b16 %v1766
    %v1821 = vunpack.c.h.b16 %v1766
    %v1822 = vunpack.c.l.b16 %v1767
    %v1823 = vunpack.c.h.b16 %v1767
    %v1824 = vunpack.c.l.b16 %v1768
    %v1825 = vunpack.c.h.b16 %v1768
    %v1826 = vunpack.c.l.b16 %v1769
    %v1827 = vunpack.c.h.b16 %v1769
    %v1828 = vunpack.c.l.b16 %v1770
    %v1829 = vunpack.c.h.b16 %v1770
    %v1830 = vunpack.c.l.b16 %v1771
    %v1831 = vunpack.c.h.b16 %v1771
    %v1832 = vpack.c.b16 %v1802, %v1800
    %v1833 = vpack.c.b16 %v1803, %v1801
    %v1834 = vpack.c.b16 %v1806, %v1804
    %v1835 = vpack.c.b16 %v1807, %v1805
    %v1836 = vpack.c.b16 %v1810, %v1808
    %v1837 = vpack.c.b16 %v1811, %v1809
    %v1838 = vpack.c.b16 %v1814, %v1812
    %v1839 = vpack.c.b16 %v1815, %v1813
    %v1840 = vpack.c.b16 %v1818, %v1816
    %v1841 = vpack.c.b16 %v1819, %v1817
    %v1842 = vpack.c.b16 %v1822, %v1820
    %v1843 = vpack.c.b16 %v1823, %v1821
    %v1844 = vpack.c.b16 %v1826, %v1824
    %v1845 = vpack.c.b16 %v1827, %v1825
    %v1846 = vpack.c.b16 %v1830, %v1828
    %v1847 = vpack.c.b16 %v1831, %v1829
    %1864 = vmatprep.subr.bf16.mxu0 %v1847
    %1865 = vmatpush1.bf16.msra.mxu0 %v1846
    %1866 = vmatprep.subr.bf16.mxu0 %v1845
    %1867 = vmatpush1.bf16.msra.mxu0 %v1844
    %1868 = vmatprep.subr.bf16.mxu0 %v1843
    %1869 = vmatpush1.bf16.msra.mxu0 %v1842
    %1870 = vmatprep.subr.bf16.mxu0 %v1841
    %1871 = vmatpush1.bf16.msra.mxu0 %v1840
    %1872 = vmatprep.subr.bf16.mxu0 %v1839
    %1873 = vmatpush1.bf16.msra.mxu0 %v1838
    %1874 = vmatprep.subr.bf16.mxu0 %v1837
    %1875 = vmatpush1.bf16.msra.mxu0 %v1836
    %1876 = vmatprep.subr.bf16.mxu0 %v1835
    %1877 = vmatpush1.bf16.msra.mxu0 %v1834
    %1878 = vmatprep.subr.bf16.mxu0 %v1833
    %1879 = vmatpush1.bf16.msra.mxu0 %v1832
    %1880 = vmatprep.subr.bf16.mxu0 0
    %1881 = vmatpush2.bf16.msra.mxu0 0
    %1882 = vmatprep.subr.bf16.mxu0 0
    %1883 = vmatpush2.bf16.msra.mxu0 0
    %1884 = vmatprep.subr.bf16.mxu0 0
    %1885 = vmatpush2.bf16.msra.mxu0 0
    %1886 = vmatprep.subr.bf16.mxu0 0
    %1887 = vmatpush2.bf16.msra.mxu0 0
    %1888 = vmatprep.subr.bf16.mxu0 0
    %1889 = vmatpush2.bf16.msra.mxu0 0
    %1890 = vmatprep.subr.bf16.mxu0 0
    %1891 = vmatpush2.bf16.msra.mxu0 0
    %1892 = vmatprep.subr.bf16.mxu0 0
    %1893 = vmatpush2.bf16.msra.mxu0 0
    %1894 = vmatprep.subr.bf16.mxu0 0
    %1895 = vmatpush2.bf16.msra.mxu0 0
    %1896 = vmatprep.mubr.bf16.mxu0 0
    %1897 = vmatmul.mubr.bf16.gmra.mxu0 %v1755
    %v1898 = vpop.f32.mrf.mxu0
    %v1899 = vadd.f32 %v1777, %v1898
    %v1900 = vpop.f32.mrf.mxu0
    %v1901 = vadd.f32 %v1781, %v1900
    %v1902 = vpop.f32.mrf.mxu0
    %v1903 = vpop.f32.mrf.mxu0
    %1904 = vdwg.mxu0
    %v1905 = vmul.f32 %v1899, 0.5
    %v1906 = vmul.f32 %v1901, 0.5
    %v1907 = vmul.f32 %v1899, 0.70710677
    %v1908 = vmul.f32 %v1901, 0.70710677
    %v1909 = verf.f32.pop %v1907
    %v1910 = verf.f32.pop %v1908
    %v1911 = vadd.f32 %v1909, 1.0
    %v1912 = vadd.f32 %v1910, 1.0
    %v1913 = vmul.f32 %v1905, %v1911
    %v1914 = vmul.f32 %v1906, %v1912
    %v1915 = vadd.f32 %v1540, %v1913
    %v1916 = vadd.f32 %v1542, %v1914
    %v1917 = vadd.f32 %v583, %v1915
    %v1918 = vadd.f32 %v585, %v1916
    %v1919 = vpack.c.bf16 %v1253, %v1253
    %v1920 = vpack.c.bf16 %v1254, %v1254
    %v1921 = vld [vmem:[#allocation16] sm:$0xff]
    %v1922 = vld [vmem:[#allocation16 + $0x8] sm:$0xff]
    %v1923 = vld [vmem:[#allocation16 + $0x10] sm:$0xff]
    %v1924 = vld [vmem:[#allocation16 + $0x18] sm:$0xff]
    %v1925 = vld [vmem:[#allocation16 + $0x20] sm:$0xff]
    %v1926 = vld [vmem:[#allocation16 + $0x28] sm:$0xff]
    %v1927 = vld [vmem:[#allocation16 + $0x30] sm:$0xff]
    %v1928 = vld [vmem:[#allocation16 + $0x38] sm:$0xff]
    %v1929 = vld [vmem:[#allocation16 + $0x40] sm:$0xff]
    %v1930 = vld [vmem:[#allocation16 + $0x48] sm:$0xff]
    %v1931 = vld [vmem:[#allocation16 + $0x50] sm:$0xff]
    %v1932 = vld [vmem:[#allocation16 + $0x58] sm:$0xff]
    %v1933 = vld [vmem:[#allocation16 + $0x60] sm:$0xff]
    %v1934 = vld [vmem:[#allocation16 + $0x68] sm:$0xff]
    %v1935 = vld [vmem:[#allocation16 + $0x70] sm:$0xff]
    %v1936 = vld [vmem:[#allocation16 + $0x78] sm:$0xff]
    %v1937 = vld [vmem:[#allocation16 + $0x80] sm:$0xff]
    %v1938 = vld [vmem:[#allocation16 + $0x88] sm:$0xff]
    %v1939 = vld [vmem:[#allocation16 + $0x90] sm:$0xff]
    %v1940 = vld [vmem:[#allocation16 + $0x98] sm:$0xff]
    %v1941 = vld [vmem:[#allocation16 + $0xa0] sm:$0xff]
    %v1942 = vld [vmem:[#allocation16 + $0xa8] sm:$0xff]
    %v1943 = vld [vmem:[#allocation16 + $0xb0] sm:$0xff]
    %v1944 = vld [vmem:[#allocation16 + $0xb8] sm:$0xff]
    %v1945 = vld [vmem:[#allocation16 + $0xc0] sm:$0xff]
    %v1946 = vld [vmem:[#allocation16 + $0xc8] sm:$0xff]
    %v1947 = vld [vmem:[#allocation16 + $0xd0] sm:$0xff]
    %v1948 = vld [vmem:[#allocation16 + $0xd8] sm:$0xff]
    %v1949 = vld [vmem:[#allocation16 + $0xe0] sm:$0xff]
    %v1950 = vld [vmem:[#allocation16 + $0xe8] sm:$0xff]
    %v1951 = vld [vmem:[#allocation16 + $0xf0] sm:$0xff]
    %v1952 = vld [vmem:[#allocation16 + $0xf8] sm:$0xff]
    %v1953 = vld [vmem:[%s55] sm:$0x3]
    %v1955 = vlaneseq
    %v1956 = vshrl.u32 %v1955, 7
    %v1957 = vsub.s32 0, %v1956
    %v1958 = vrot.slane %v1953, %v1957
    %v1959 = vlaneseq
    %v1960 = vshrl.u32 %v1959, 7
    %v1961 = vsub.s32 1, %v1960
    %v1962 = vrot.slane %v1953, %v1961
    %v1997 = vunpack.c.l.b16 %v1921
    %v1998 = vunpack.c.h.b16 %v1921
    %v1999 = vunpack.c.l.b16 %v1922
    %v2000 = vunpack.c.h.b16 %v1922
    %v2001 = vunpack.c.l.b16 %v1923
    %v2002 = vunpack.c.h.b16 %v1923
    %v2003 = vunpack.c.l.b16 %v1924
    %v2004 = vunpack.c.h.b16 %v1924
    %v2005 = vunpack.c.l.b16 %v1925
    %v2006 = vunpack.c.h.b16 %v1925
    %v2007 = vunpack.c.l.b16 %v1926
    %v2008 = vunpack.c.h.b16 %v1926
    %v2009 = vunpack.c.l.b16 %v1927
    %v2010 = vunpack.c.h.b16 %v1927
    %v2011 = vunpack.c.l.b16 %v1928
    %v2012 = vunpack.c.h.b16 %v1928
    %v2013 = vunpack.c.l.b16 %v1929
    %v2014 = vunpack.c.h.b16 %v1929
    %v2015 = vunpack.c.l.b16 %v1930
    %v2016 = vunpack.c.h.b16 %v1930
    %v2017 = vunpack.c.l.b16 %v1931
    %v2018 = vunpack.c.h.b16 %v1931
    %v2019 = vunpack.c.l.b16 %v1932
    %v2020 = vunpack.c.h.b16 %v1932
    %v2021 = vunpack.c.l.b16 %v1933
    %v2022 = vunpack.c.h.b16 %v1933
    %v2023 = vunpack.c.l.b16 %v1934
    %v2024 = vunpack.c.h.b16 %v1934
    %v2025 = vunpack.c.l.b16 %v1935
    %v2026 = vunpack.c.h.b16 %v1935
    %v2027 = vunpack.c.l.b16 %v1936
    %v2028 = vunpack.c.h.b16 %v1936
    %v2029 = vunpack.c.l.b16 %v1937
    %v2030 = vunpack.c.h.b16 %v1937
    %v2031 = vunpack.c.l.b16 %v1938
    %v2032 = vunpack.c.h.b16 %v1938
    %v2033 = vunpack.c.l.b16 %v1939
    %v2034 = vunpack.c.h.b16 %v1939
    %v2035 = vunpack.c.l.b16 %v1940
    %v2036 = vunpack.c.h.b16 %v1940
    %v2037 = vunpack.c.l.b16 %v1941
    %v2038 = vunpack.c.h.b16 %v1941
    %v2039 = vunpack.c.l.b16 %v1942
    %v2040 = vunpack.c.h.b16 %v1942
    %v2041 = vunpack.c.l.b16 %v1943
    %v2042 = vunpack.c.h.b16 %v1943
    %v2043 = vunpack.c.l.b16 %v1944
    %v2044 = vunpack.c.h.b16 %v1944
    %v2045 = vunpack.c.l.b16 %v1945
    %v2046 = vunpack.c.h.b16 %v1945
    %v2047 = vunpack.c.l.b16 %v1946
    %v2048 = vunpack.c.h.b16 %v1946
    %v2049 = vunpack.c.l.b16 %v1947
    %v2050 = vunpack.c.h.b16 %v1947
    %v2051 = vunpack.c.l.b16 %v1948
    %v2052 = vunpack.c.h.b16 %v1948
    %v2053 = vunpack.c.l.b16 %v1949
    %v2054 = vunpack.c.h.b16 %v1949
    %v2055 = vunpack.c.l.b16 %v1950
    %v2056 = vunpack.c.h.b16 %v1950
    %v2057 = vunpack.c.l.b16 %v1951
    %v2058 = vunpack.c.h.b16 %v1951
    %v2059 = vunpack.c.l.b16 %v1952
    %v2060 = vunpack.c.h.b16 %v1952
    %v2061 = vpack.c.b16 %v1999, %v1997
    %v2062 = vpack.c.b16 %v2000, %v1998
    %v2063 = vpack.c.b16 %v2003, %v2001
    %v2064 = vpack.c.b16 %v2004, %v2002
    %v2065 = vpack.c.b16 %v2007, %v2005
    %v2066 = vpack.c.b16 %v2008, %v2006
    %v2067 = vpack.c.b16 %v2011, %v2009
    %v2068 = vpack.c.b16 %v2012, %v2010
    %v2069 = vpack.c.b16 %v2015, %v2013
    %v2070 = vpack.c.b16 %v2016, %v2014
    %v2071 = vpack.c.b16 %v2019, %v2017
    %v2072 = vpack.c.b16 %v2020, %v2018
    %v2073 = vpack.c.b16 %v2023, %v2021
    %v2074 = vpack.c.b16 %v2024, %v2022
    %v2075 = vpack.c.b16 %v2027, %v2025
    %v2076 = vpack.c.b16 %v2028, %v2026
    %v2077 = vpack.c.b16 %v2031, %v2029
    %v2078 = vpack.c.b16 %v2032, %v2030
    %v2079 = vpack.c.b16 %v2035, %v2033
    %v2080 = vpack.c.b16 %v2036, %v2034
    %v2081 = vpack.c.b16 %v2039, %v2037
    %v2082 = vpack.c.b16 %v2040, %v2038
    %v2083 = vpack.c.b16 %v2043, %v2041
    %v2084 = vpack.c.b16 %v2044, %v2042
    %v2085 = vpack.c.b16 %v2047, %v2045
    %v2086 = vpack.c.b16 %v2048, %v2046
    %v2087 = vpack.c.b16 %v2051, %v2049
    %v2088 = vpack.c.b16 %v2052, %v2050
    %v2089 = vpack.c.b16 %v2055, %v2053
    %v2090 = vpack.c.b16 %v2056, %v2054
    %v2091 = vpack.c.b16 %v2059, %v2057
    %v2092 = vpack.c.b16 %v2060, %v2058
    %2125 = vmatprep.subr.bf16.mxu0 %v2076
    %2126 = vmatpush1.bf16.msra.mxu0 %v2075
    %2127 = vmatprep.subr.bf16.mxu0 %v2074
    %2128 = vmatpush1.bf16.msra.mxu0 %v2073
    %2129 = vmatprep.subr.bf16.mxu0 %v2072
    %2130 = vmatpush1.bf16.msra.mxu0 %v2071
    %2131 = vmatprep.subr.bf16.mxu0 %v2070
    %2132 = vmatpush1.bf16.msra.mxu0 %v2069
    %2133 = vmatprep.subr.bf16.mxu0 %v2068
    %2134 = vmatpush1.bf16.msra.mxu0 %v2067
    %2135 = vmatprep.subr.bf16.mxu0 %v2066
    %2136 = vmatpush1.bf16.msra.mxu0 %v2065
    %2137 = vmatprep.subr.bf16.mxu0 %v2064
    %2138 = vmatpush1.bf16.msra.mxu0 %v2063
    %2139 = vmatprep.subr.bf16.mxu0 %v2062
    %2140 = vmatpush1.bf16.msra.mxu0 %v2061
    %2141 = vmatprep.subr.bf16.mxu0 %v2092
    %2142 = vmatpush2.bf16.msra.mxu0 %v2091
    %2143 = vmatprep.subr.bf16.mxu0 %v2090
    %2144 = vmatpush2.bf16.msra.mxu0 %v2089
    %2145 = vmatprep.subr.bf16.mxu0 %v2088
    %2146 = vmatpush2.bf16.msra.mxu0 %v2087
    %2147 = vmatprep.subr.bf16.mxu0 %v2086
    %2148 = vmatpush2.bf16.msra.mxu0 %v2085
    %2149 = vmatprep.subr.bf16.mxu0 %v2084
    %2150 = vmatpush2.bf16.msra.mxu0 %v2083
    %2151 = vmatprep.subr.bf16.mxu0 %v2082
    %2152 = vmatpush2.bf16.msra.mxu0 %v2081
    %2153 = vmatprep.subr.bf16.mxu0 %v2080
    %2154 = vmatpush2.bf16.msra.mxu0 %v2079
    %2155 = vmatprep.subr.bf16.mxu0 %v2078
    %2156 = vmatpush2.bf16.msra.mxu0 %v2077
    %2157 = vmatprep.mubr.bf16.mxu0 %v1920
    %2158 = vmatmul.mubr.bf16.gmra.mxu0 %v1919
    %v2159 = vpop.f32.mrf.mxu0
    %v2160 = vadd.f32 %v1958, %v2159
    %v2161 = vpop.f32.mrf.mxu0
    %v2162 = vadd.f32 %v1962, %v2161
    %v2163 = vpop.f32.mrf.mxu0
    %v2164 = vpop.f32.mrf.mxu0
    %2165 = vdwg.mxu0
    %v2166 = vmax.f32 %v2160, 0.0
    %v2167 = vmax.f32 %v2162, 0.0
    %v2168 = vpack.c.bf16 %v1917, %v1917
    %v2169 = vpack.c.bf16 %v1918, %v1918
    %v2170 = vld [vmem:[#allocation18] sm:$0xff]
    %v2171 = vld [vmem:[#allocation18 + $0x8] sm:$0xff]
    %v2172 = vld [vmem:[#allocation18 + $0x10] sm:$0xff]
    %v2173 = vld [vmem:[#allocation18 + $0x18] sm:$0xff]
    %v2174 = vld [vmem:[#allocation18 + $0x20] sm:$0xff]
    %v2175 = vld [vmem:[#allocation18 + $0x28] sm:$0xff]
    %v2176 = vld [vmem:[#allocation18 + $0x30] sm:$0xff]
    %v2177 = vld [vmem:[#allocation18 + $0x38] sm:$0xff]
    %v2178 = vld [vmem:[#allocation18 + $0x40] sm:$0xff]
    %v2179 = vld [vmem:[#allocation18 + $0x48] sm:$0xff]
    %v2180 = vld [vmem:[#allocation18 + $0x50] sm:$0xff]
    %v2181 = vld [vmem:[#allocation18 + $0x58] sm:$0xff]
    %v2182 = vld [vmem:[#allocation18 + $0x60] sm:$0xff]
    %v2183 = vld [vmem:[#allocation18 + $0x68] sm:$0xff]
    %v2184 = vld [vmem:[#allocation18 + $0x70] sm:$0xff]
    %v2185 = vld [vmem:[#allocation18 + $0x78] sm:$0xff]
    %v2186 = vld [vmem:[#allocation18 + $0x80] sm:$0xff]
    %v2187 = vld [vmem:[#allocation18 + $0x88] sm:$0xff]
    %v2188 = vld [vmem:[#allocation18 + $0x90] sm:$0xff]
    %v2189 = vld [vmem:[#allocation18 + $0x98] sm:$0xff]
    %v2190 = vld [vmem:[#allocation18 + $0xa0] sm:$0xff]
    %v2191 = vld [vmem:[#allocation18 + $0xa8] sm:$0xff]
    %v2192 = vld [vmem:[#allocation18 + $0xb0] sm:$0xff]
    %v2193 = vld [vmem:[#allocation18 + $0xb8] sm:$0xff]
    %v2194 = vld [vmem:[#allocation18 + $0xc0] sm:$0xff]
    %v2195 = vld [vmem:[#allocation18 + $0xc8] sm:$0xff]
    %v2196 = vld [vmem:[#allocation18 + $0xd0] sm:$0xff]
    %v2197 = vld [vmem:[#allocation18 + $0xd8] sm:$0xff]
    %v2198 = vld [vmem:[#allocation18 + $0xe0] sm:$0xff]
    %v2199 = vld [vmem:[#allocation18 + $0xe8] sm:$0xff]
    %v2200 = vld [vmem:[#allocation18 + $0xf0] sm:$0xff]
    %v2201 = vld [vmem:[#allocation18 + $0xf8] sm:$0xff]
    %v2202 = vld [vmem:[%s59] sm:$0x3]
    %v2204 = vlaneseq
    %v2205 = vshrl.u32 %v2204, 7
    %v2206 = vsub.s32 0, %v2205
    %v2207 = vrot.slane %v2202, %v2206
    %v2208 = vlaneseq
    %v2209 = vshrl.u32 %v2208, 7
    %v2210 = vsub.s32 1, %v2209
    %v2211 = vrot.slane %v2202, %v2210
    %v2246 = vunpack.c.l.b16 %v2170
    %v2247 = vunpack.c.h.b16 %v2170
    %v2248 = vunpack.c.l.b16 %v2171
    %v2249 = vunpack.c.h.b16 %v2171
    %v2250 = vunpack.c.l.b16 %v2172
    %v2251 = vunpack.c.h.b16 %v2172
    %v2252 = vunpack.c.l.b16 %v2173
    %v2253 = vunpack.c.h.b16 %v2173
    %v2254 = vunpack.c.l.b16 %v2174
    %v2255 = vunpack.c.h.b16 %v2174
    %v2256 = vunpack.c.l.b16 %v2175
    %v2257 = vunpack.c.h.b16 %v2175
    %v2258 = vunpack.c.l.b16 %v2176
    %v2259 = vunpack.c.h.b16 %v2176
    %v2260 = vunpack.c.l.b16 %v2177
    %v2261 = vunpack.c.h.b16 %v2177
    %v2262 = vunpack.c.l.b16 %v2178
    %v2263 = vunpack.c.h.b16 %v2178
    %v2264 = vunpack.c.l.b16 %v2179
    %v2265 = vunpack.c.h.b16 %v2179
    %v2266 = vunpack.c.l.b16 %v2180
    %v2267 = vunpack.c.h.b16 %v2180
    %v2268 = vunpack.c.l.b16 %v2181
    %v2269 = vunpack.c.h.b16 %v2181
    %v2270 = vunpack.c.l.b16 %v2182
    %v2271 = vunpack.c.h.b16 %v2182
    %v2272 = vunpack.c.l.b16 %v2183
    %v2273 = vunpack.c.h.b16 %v2183
    %v2274 = vunpack.c.l.b16 %v2184
    %v2275 = vunpack.c.h.b16 %v2184
    %v2276 = vunpack.c.l.b16 %v2185
    %v2277 = vunpack.c.h.b16 %v2185
    %v2278 = vunpack.c.l.b16 %v2186
    %v2279 = vunpack.c.h.b16 %v2186
    %v2280 = vunpack.c.l.b16 %v2187
    %v2281 = vunpack.c.h.b16 %v2187
    %v2282 = vunpack.c.l.b16 %v2188
    %v2283 = vunpack.c.h.b16 %v2188
    %v2284 = vunpack.c.l.b16 %v2189
    %v2285 = vunpack.c.h.b16 %v2189
    %v2286 = vunpack.c.l.b16 %v2190
    %v2287 = vunpack.c.h.b16 %v2190
    %v2288 = vunpack.c.l.b16 %v2191
    %v2289 = vunpack.c.h.b16 %v2191
    %v2290 = vunpack.c.l.b16 %v2192
    %v2291 = vunpack.c.h.b16 %v2192
    %v2292 = vunpack.c.l.b16 %v2193
    %v2293 = vunpack.c.h.b16 %v2193
    %v2294 = vunpack.c.l.b16 %v2194
    %v2295 = vunpack.c.h.b16 %v2194
    %v2296 = vunpack.c.l.b16 %v2195
    %v2297 = vunpack.c.h.b16 %v2195
    %v2298 = vunpack.c.l.b16 %v2196
    %v2299 = vunpack.c.h.b16 %v2196
    %v2300 = vunpack.c.l.b16 %v2197
    %v2301 = vunpack.c.h.b16 %v2197
    %v2302 = vunpack.c.l.b16 %v2198
    %v2303 = vunpack.c.h.b16 %v2198
    %v2304 = vunpack.c.l.b16 %v2199
    %v2305 = vunpack.c.h.b16 %v2199
    %v2306 = vunpack.c.l.b16 %v2200
    %v2307 = vunpack.c.h.b16 %v2200
    %v2308 = vunpack.c.l.b16 %v2201
    %v2309 = vunpack.c.h.b16 %v2201
    %v2310 = vpack.c.b16 %v2248, %v2246
    %v2311 = vpack.c.b16 %v2249, %v2247
    %v2312 = vpack.c.b16 %v2252, %v2250
    %v2313 = vpack.c.b16 %v2253, %v2251
    %v2314 = vpack.c.b16 %v2256, %v2254
    %v2315 = vpack.c.b16 %v2257, %v2255
    %v2316 = vpack.c.b16 %v2260, %v2258
    %v2317 = vpack.c.b16 %v2261, %v2259
    %v2318 = vpack.c.b16 %v2264, %v2262
    %v2319 = vpack.c.b16 %v2265, %v2263
    %v2320 = vpack.c.b16 %v2268, %v2266
    %v2321 = vpack.c.b16 %v2269, %v2267
    %v2322 = vpack.c.b16 %v2272, %v2270
    %v2323 = vpack.c.b16 %v2273, %v2271
    %v2324 = vpack.c.b16 %v2276, %v2274
    %v2325 = vpack.c.b16 %v2277, %v2275
    %v2326 = vpack.c.b16 %v2280, %v2278
    %v2327 = vpack.c.b16 %v2281, %v2279
    %v2328 = vpack.c.b16 %v2284, %v2282
    %v2329 = vpack.c.b16 %v2285, %v2283
    %v2330 = vpack.c.b16 %v2288, %v2286
    %v2331 = vpack.c.b16 %v2289, %v2287
    %v2332 = vpack.c.b16 %v2292, %v2290
    %v2333 = vpack.c.b16 %v2293, %v2291
    %v2334 = vpack.c.b16 %v2296, %v2294
    %v2335 = vpack.c.b16 %v2297, %v2295
    %v2336 = vpack.c.b16 %v2300, %v2298
    %v2337 = vpack.c.b16 %v2301, %v2299
    %v2338 = vpack.c.b16 %v2304, %v2302
    %v2339 = vpack.c.b16 %v2305, %v2303
    %v2340 = vpack.c.b16 %v2308, %v2306
    %v2341 = vpack.c.b16 %v2309, %v2307
    %2374 = vmatprep.subr.bf16.mxu0 %v2325
    %2375 = vmatpush1.bf16.msra.mxu0 %v2324
    %2376 = vmatprep.subr.bf16.mxu0 %v2323
    %2377 = vmatpush1.bf16.msra.mxu0 %v2322
    %2378 = vmatprep.subr.bf16.mxu0 %v2321
    %2379 = vmatpush1.bf16.msra.mxu0 %v2320
    %2380 = vmatprep.subr.bf16.mxu0 %v2319
    %2381 = vmatpush1.bf16.msra.mxu0 %v2318
    %2382 = vmatprep.subr.bf16.mxu0 %v2317
    %2383 = vmatpush1.bf16.msra.mxu0 %v2316
    %2384 = vmatprep.subr.bf16.mxu0 %v2315
    %2385 = vmatpush1.bf16.msra.mxu0 %v2314
    %2386 = vmatprep.subr.bf16.mxu0 %v2313
    %2387 = vmatpush1.bf16.msra.mxu0 %v2312
    %2388 = vmatprep.subr.bf16.mxu0 %v2311
    %2389 = vmatpush1.bf16.msra.mxu0 %v2310
    %2390 = vmatprep.subr.bf16.mxu0 %v2341
    %2391 = vmatpush2.bf16.msra.mxu0 %v2340
    %2392 = vmatprep.subr.bf16.mxu0 %v2339
    %2393 = vmatpush2.bf16.msra.mxu0 %v2338
    %2394 = vmatprep.subr.bf16.mxu0 %v2337
    %2395 = vmatpush2.bf16.msra.mxu0 %v2336
    %2396 = vmatprep.subr.bf16.mxu0 %v2335
    %2397 = vmatpush2.bf16.msra.mxu0 %v2334
    %2398 = vmatprep.subr.bf16.mxu0 %v2333
    %2399 = vmatpush2.bf16.msra.mxu0 %v2332
    %2400 = vmatprep.subr.bf16.mxu0 %v2331
    %2401 = vmatpush2.bf16.msra.mxu0 %v2330
    %2402 = vmatprep.subr.bf16.mxu0 %v2329
    %2403 = vmatpush2.bf16.msra.mxu0 %v2328
    %2404 = vmatprep.subr.bf16.mxu0 %v2327
    %2405 = vmatpush2.bf16.msra.mxu0 %v2326
    %2406 = vmatprep.mubr.bf16.mxu0 %v2169
    %2407 = vmatmul.mubr.bf16.gmra.mxu0 %v2168
    %v2408 = vpop.f32.mrf.mxu0
    %v2409 = vadd.f32 %v2207, %v2408
    %v2410 = vpop.f32.mrf.mxu0
    %v2411 = vadd.f32 %v2211, %v2410
    %v2412 = vpop.f32.mrf.mxu0
    %v2413 = vpop.f32.mrf.mxu0
    %2414 = vdwg.mxu0
    %v2415 = vmax.f32 %v2409, 0.0
    %v2416 = vmax.f32 %v2411, 0.0
    %v2417 = vadd.f32 %v2166, %v2415
    %v2418 = vadd.f32 %v2167, %v2416
    %v2419 = vpack.c.bf16 %v2417, %v2417
    %v2420 = vpack.c.bf16 %v2418, %v2418
    %v2421 = vld [vmem:[#allocation19] sm:$0xf]
    %v2422 = vld [vmem:[#allocation19 + $0x4] sm:$0xf]
    %v2423 = vld [vmem:[#allocation19 + $0x8] sm:$0xf]
    %v2424 = vld [vmem:[#allocation19 + $0xc] sm:$0xf]
    %v2425 = vld [vmem:[#allocation19 + $0x10] sm:$0xf]
    %v2426 = vld [vmem:[#allocation19 + $0x14] sm:$0xf]
    %v2427 = vld [vmem:[#allocation19 + $0x18] sm:$0xf]
    %v2428 = vld [vmem:[#allocation19 + $0x1c] sm:$0xf]
    %v2429 = vld [vmem:[#allocation19 + $0x20] sm:$0xf]
    %v2430 = vld [vmem:[#allocation19 + $0x24] sm:$0xf]
    %v2431 = vld [vmem:[#allocation19 + $0x28] sm:$0xf]
    %v2432 = vld [vmem:[#allocation19 + $0x2c] sm:$0xf]
    %v2433 = vld [vmem:[#allocation19 + $0x30] sm:$0xf]
    %v2434 = vld [vmem:[#allocation19 + $0x34] sm:$0xf]
    %v2435 = vld [vmem:[#allocation19 + $0x38] sm:$0xf]
    %v2436 = vld [vmem:[#allocation19 + $0x3c] sm:$0xf]
    %v2437 = vld [vmem:[#allocation19 + $0x40] sm:$0xf]
    %v2438 = vld [vmem:[#allocation19 + $0x44] sm:$0xf]
    %v2439 = vld [vmem:[#allocation19 + $0x48] sm:$0xf]
    %v2440 = vld [vmem:[#allocation19 + $0x4c] sm:$0xf]
    %v2441 = vld [vmem:[#allocation19 + $0x50] sm:$0xf]
    %v2442 = vld [vmem:[#allocation19 + $0x54] sm:$0xf]
    %v2443 = vld [vmem:[#allocation19 + $0x58] sm:$0xf]
    %v2444 = vld [vmem:[#allocation19 + $0x5c] sm:$0xf]
    %v2445 = vld [vmem:[#allocation19 + $0x60] sm:$0xf]
    %v2446 = vld [vmem:[#allocation19 + $0x64] sm:$0xf]
    %v2447 = vld [vmem:[#allocation19 + $0x68] sm:$0xf]
    %v2448 = vld [vmem:[#allocation19 + $0x6c] sm:$0xf]
    %v2449 = vld [vmem:[#allocation19 + $0x70] sm:$0xf]
    %v2450 = vld [vmem:[#allocation19 + $0x74] sm:$0xf]
    %v2451 = vld [vmem:[#allocation19 + $0x78] sm:$0xf]
    %v2452 = vld [vmem:[#allocation19 + $0x7c] sm:$0xf]
    %v2453 = vld [vmem:[%s63] sm:$0x1]
    %v2455 = vlaneseq
    %v2456 = vshrl.u32 %v2455, 7
    %v2457 = vsub.s32 0, %v2456
    %v2458 = vrot.slane %v2453, %v2457
    %v2492 = vunpack.c.l.b16 %v2421
    %v2493 = vunpack.c.l.b16 %v2422
    %v2494 = vunpack.c.l.b16 %v2423
    %v2495 = vunpack.c.l.b16 %v2424
    %v2496 = vunpack.c.l.b16 %v2425
    %v2497 = vunpack.c.l.b16 %v2426
    %v2498 = vunpack.c.l.b16 %v2427
    %v2499 = vunpack.c.l.b16 %v2428
    %v2500 = vunpack.c.l.b16 %v2429
    %v2501 = vunpack.c.l.b16 %v2430
    %v2502 = vunpack.c.l.b16 %v2431
    %v2503 = vunpack.c.l.b16 %v2432
    %v2504 = vunpack.c.l.b16 %v2433
    %v2505 = vunpack.c.l.b16 %v2434
    %v2506 = vunpack.c.l.b16 %v2435
    %v2507 = vunpack.c.l.b16 %v2436
    %v2508 = vunpack.c.l.b16 %v2437
    %v2509 = vunpack.c.l.b16 %v2438
    %v2510 = vunpack.c.l.b16 %v2439
    %v2511 = vunpack.c.l.b16 %v2440
    %v2512 = vunpack.c.l.b16 %v2441
    %v2513 = vunpack.c.l.b16 %v2442
    %v2514 = vunpack.c.l.b16 %v2443
    %v2515 = vunpack.c.l.b16 %v2444
    %v2516 = vunpack.c.l.b16 %v2445
    %v2517 = vunpack.c.l.b16 %v2446
    %v2518 = vunpack.c.l.b16 %v2447
    %v2519 = vunpack.c.l.b16 %v2448
    %v2520 = vunpack.c.l.b16 %v2449
    %v2521 = vunpack.c.l.b16 %v2450
    %v2522 = vunpack.c.l.b16 %v2451
    %v2523 = vunpack.c.l.b16 %v2452
    %v2524 = vpack.c.b16 %v2493, %v2492
    %v2525 = vpack.c.b16 %v2495, %v2494
    %v2526 = vpack.c.b16 %v2497, %v2496
    %v2527 = vpack.c.b16 %v2499, %v2498
    %v2528 = vpack.c.b16 %v2501, %v2500
    %v2529 = vpack.c.b16 %v2503, %v2502
    %v2530 = vpack.c.b16 %v2505, %v2504
    %v2531 = vpack.c.b16 %v2507, %v2506
    %v2532 = vpack.c.b16 %v2509, %v2508
    %v2533 = vpack.c.b16 %v2511, %v2510
    %v2534 = vpack.c.b16 %v2513, %v2512
    %v2535 = vpack.c.b16 %v2515, %v2514
    %v2536 = vpack.c.b16 %v2517, %v2516
    %v2537 = vpack.c.b16 %v2519, %v2518
    %v2538 = vpack.c.b16 %v2521, %v2520
    %v2539 = vpack.c.b16 %v2523, %v2522
    %2556 = vmatprep.subr.bf16.mxu0 0
    %2557 = vmatpush1.bf16.msra.mxu0 %v2531
    %2558 = vmatprep.subr.bf16.mxu0 0
    %2559 = vmatpush1.bf16.msra.mxu0 %v2530
    %2560 = vmatprep.subr.bf16.mxu0 0
    %2561 = vmatpush1.bf16.msra.mxu0 %v2529
    %2562 = vmatprep.subr.bf16.mxu0 0
    %2563 = vmatpush1.bf16.msra.mxu0 %v2528
    %2564 = vmatprep.subr.bf16.mxu0 0
    %2565 = vmatpush1.bf16.msra.mxu0 %v2527
    %2566 = vmatprep.subr.bf16.mxu0 0
    %2567 = vmatpush1.bf16.msra.mxu0 %v2526
    %2568 = vmatprep.subr.bf16.mxu0 0
    %2569 = vmatpush1.bf16.msra.mxu0 %v2525
    %2570 = vmatprep.subr.bf16.mxu0 0
    %2571 = vmatpush1.bf16.msra.mxu0 %v2524
    %2572 = vmatprep.subr.bf16.mxu0 0
    %2573 = vmatpush2.bf16.msra.mxu0 %v2539
    %2574 = vmatprep.subr.bf16.mxu0 0
    %2575 = vmatpush2.bf16.msra.mxu0 %v2538
    %2576 = vmatprep.subr.bf16.mxu0 0
    %2577 = vmatpush2.bf16.msra.mxu0 %v2537
    %2578 = vmatprep.subr.bf16.mxu0 0
    %2579 = vmatpush2.bf16.msra.mxu0 %v2536
    %2580 = vmatprep.subr.bf16.mxu0 0
    %2581 = vmatpush2.bf16.msra.mxu0 %v2535
    %2582 = vmatprep.subr.bf16.mxu0 0
    %2583 = vmatpush2.bf16.msra.mxu0 %v2534
    %2584 = vmatprep.subr.bf16.mxu0 0
    %2585 = vmatpush2.bf16.msra.mxu0 %v2533
    %2586 = vmatprep.subr.bf16.mxu0 0
    %2587 = vmatpush2.bf16.msra.mxu0 %v2532
    %2588 = vmatprep.mubr.bf16.mxu0 %v2420
    %2589 = vmatmul.mubr.bf16.gmra.mxu0 %v2419
    %v2590 = vpop.f32.mrf.mxu0
    %v2591 = vadd.f32 %v2458, %v2590
    %v2592 = vpop.f32.mrf.mxu0
    %v2593 = vpop.f32.mrf.mxu0
    %v2594 = vpop.f32.mrf.mxu0
    %2595 = vdwg.mxu0
    %2596 = vst [vmem:[%s65] sm:$0xff] %v2591
    // Predicated region
    $region174: #{av_model_v3_forward.1} parent=1 // pred_check
      _
    $region175: #{av_model_v3_forward.1} parent=1 // pred_check_branch
      %2598 = sbr.rel (0) target = $region177
    $region176: #{av_model_v3_forward.1} parent=1 // pred_region
      _
    $region177: #{av_model_v3_forward.1} parent=1 // pred_fallthru
      _
    // Predicated region
    $region178: #{av_model_v3_forward.1} parent=1 // pred_check
      _
    $region179: #{av_model_v3_forward.1} parent=1 // pred_check_branch
      %2600 = sbr.rel (0) target = $region181
    $region180: #{av_model_v3_forward.1} parent=1 // pred_region
      _
    $region181: #{av_model_v3_forward.1} parent=1 // pred_fallthru
      _
    %2601 = vsyncpa [#allocation4], 1
    %2602 = vsyncpa [#allocation8], 1
    %2603 = vsyncpa [#allocation11], 1
    %2604 = vsyncpa [#allocation14], 1
    %2605 = vsyncpa [#allocation17], 1
    %2606 = vsyncpa [#allocation20], 1
    %2607 = vsyncpa [#allocation5], 1

</llo_original>
